<compile_context>
chip_gen: v7x
topology: tpu7x:2x2x1
jax: 0.10.0
libtpu: 0.0.40
codegen_flags: <defaults>
</compile_context>

<pallas_src>
import functools

import jax
import jax.numpy as jnp
from jax.experimental import pallas as pl
from jax.experimental.pallas import tpu as pltpu


_VMEM_LIMIT = 64 * 1024 * 1024  # <= physical VMEM on v7x, well under v5e/v6e


def _fit(dim, target):
    """Use `target` as tile size if it evenly divides `dim`, else the full dim."""
    if dim >= target and dim % target == 0:
        return target
    return dim


# ---------------------------------------------------------------------------
# Fused tiled matmul:  y = act(x @ w + b) [+ residual] [-> LayerNorm]
# ---------------------------------------------------------------------------
def _linear_kernel(*refs, act, has_residual, has_ln, eps):
    x_ref, w_ref, b_ref = refs[0], refs[1], refs[2]
    i = 3
    res_ref = None
    g_ref = beta_ref = None
    if has_residual:
        res_ref = refs[i]
        i += 1
    if has_ln:
        g_ref, beta_ref = refs[i], refs[i + 1]
        i += 2
    o_ref, acc_ref = refs[i], refs[i + 1]

    k = pl.program_id(2)

    @pl.when(k == 0)
    def _init():
        acc_ref[...] = jnp.zeros_like(acc_ref)

    acc_ref[...] += jnp.dot(x_ref[...], w_ref[...],
                            preferred_element_type=jnp.float32)

    @pl.when(k == pl.num_programs(2) - 1)
    def _finalize():
        y = acc_ref[...] + b_ref[...].astype(jnp.float32)
        if act == "gelu":
            # tanh-approx GELU, computed in f32 (EUP handles the tanh).
            y = 0.5 * y * (1.0 + jnp.tanh(
                0.7978845608028654 * (y + 0.044715 * y * y * y)))
        if has_residual:
            y = y + res_ref[...].astype(jnp.float32)
        if has_ln:
            mu = jnp.mean(y, axis=-1, keepdims=True)
            yc = y - mu
            var = jnp.mean(yc * yc, axis=-1, keepdims=True)
            y = (yc * jax.lax.rsqrt(var + eps) * g_ref[...].astype(jnp.float32)
                 + beta_ref[...].astype(jnp.float32))
        o_ref[...] = y.astype(o_ref.dtype)


def linear(x, w, b, *, act=None, residual=None, ln=None, eps=1e-12,
           out_dtype=jnp.bfloat16, tm=256, tn=512, tk=512):
    M, K = x.shape
    N = w.shape[1]
    tm = _fit(M, tm)
    tk = _fit(K, tk)
    tn = N if ln is not None else _fit(N, tn)   # LayerNorm needs the full row

    in_specs = [
        pl.BlockSpec((tm, tk), lambda i, j, k: (i, k)),
        pl.BlockSpec((tk, tn), lambda i, j, k: (k, j)),
        pl.BlockSpec((1, tn), lambda i, j, k: (0, j)),
    ]
    args = [x, w, b.reshape(1, N)]
    if residual is not None:
        # index_map is k-invariant -> residual tile is DMAed once per (i, j).
        in_specs.append(pl.BlockSpec((tm, tn), lambda i, j, k: (i, j)))
        args.append(residual)
    if ln is not None:
        gamma, beta = ln
        in_specs.append(pl.BlockSpec((1, tn), lambda i, j, k: (0, j)))
        in_specs.append(pl.BlockSpec((1, tn), lambda i, j, k: (0, j)))
        args += [gamma.reshape(1, N), beta.reshape(1, N)]

    return pl.pallas_call(
        functools.partial(_linear_kernel, act=act,
                          has_residual=residual is not None,
                          has_ln=ln is not None, eps=eps),
        out_shape=jax.ShapeDtypeStruct((M, N), out_dtype),
        grid=(M // tm, N // tn, K // tk),
        in_specs=in_specs,
        out_specs=pl.BlockSpec((tm, tn), lambda i, j, k: (i, j)),
        scratch_shapes=[pltpu.VMEM((tm, tn), jnp.float32)],
        compiler_params=pltpu.CompilerParams(
            dimension_semantics=("parallel", "parallel", "arbitrary"),
            vmem_limit_bytes=_VMEM_LIMIT),
    )(*args)


# ---------------------------------------------------------------------------
# Row-tiled LayerNorm (no residual) for the embedding output
# ---------------------------------------------------------------------------
def _ln_kernel(x_ref, g_ref, b_ref, o_ref, *, eps):
    x = x_ref[...].astype(jnp.float32)
    mu = jnp.mean(x, axis=-1, keepdims=True)
    xc = x - mu
    var = jnp.mean(xc * xc, axis=-1, keepdims=True)
    o_ref[...] = (xc * jax.lax.rsqrt(var + eps) * g_ref[...]
                  + b_ref[...]).astype(o_ref.dtype)


def layernorm(x, gamma, beta, *, eps=1e-12, out_dtype=jnp.bfloat16, tm=512):
    M, H = x.shape
    tm = _fit(M, tm)
    return pl.pallas_call(
        functools.partial(_ln_kernel, eps=eps),
        out_shape=jax.ShapeDtypeStruct((M, H), out_dtype),
        grid=(M // tm,),
        in_specs=[pl.BlockSpec((tm, H), lambda i: (i, 0)),
                  pl.BlockSpec((1, H), lambda i: (0, 0)),
                  pl.BlockSpec((1, H), lambda i: (0, 0))],
        out_specs=pl.BlockSpec((tm, H), lambda i: (i, 0)),
        compiler_params=pltpu.CompilerParams(
            dimension_semantics=("parallel",), vmem_limit_bytes=_VMEM_LIMIT),
    )(x, gamma.reshape(1, H), beta.reshape(1, H))


# ---------------------------------------------------------------------------
# Multi-head self attention: grid over batch, all heads per step, fused QKV in
# ---------------------------------------------------------------------------
def _attn_kernel(qkv_ref, mask_ref, o_ref, *, n_heads, d_head, scale):
    H = n_heads * d_head
    qkv = qkv_ref[0]                 # (S, 3H) bf16
    mask = mask_ref[0]               # (1, S)  f32 additive mask
    ctx = []
    for h in range(n_heads):
        q = qkv[:, h * d_head:(h + 1) * d_head]
        k = qkv[:, H + h * d_head:H + (h + 1) * d_head]
        v = qkv[:, 2 * H + h * d_head:2 * H + (h + 1) * d_head]
        # q @ k^T with f32 accumulation on the MXU.
        s = jax.lax.dot_general(q, k, (((1,), (1,)), ((), ())),
                                preferred_element_type=jnp.float32) * scale
        s = s + mask
        s = s - jnp.max(s, axis=-1, keepdims=True)
        p = jnp.exp(s)
        p = p * pl.reciprocal(jnp.sum(p, axis=-1, keepdims=True), approx=True)
        ctx.append(jnp.dot(p.astype(qkv.dtype), v,
                           preferred_element_type=jnp.float32))
    # Lane-dense (S, H) store — no per-head partial stores, no wrapper transposes.
    o_ref[0] = jnp.concatenate(ctx, axis=-1).astype(o_ref.dtype)


def attention(qkv, addmask, n_heads, d_head, scale):
    B, S, threeH = qkv.shape
    H = n_heads * d_head
    return pl.pallas_call(
        functools.partial(_attn_kernel, n_heads=n_heads, d_head=d_head,
                          scale=scale),
        out_shape=jax.ShapeDtypeStruct((B, S, H), qkv.dtype),
        grid=(B,),
        in_specs=[pl.BlockSpec((1, S, threeH), lambda b: (b, 0, 0)),
                  pl.BlockSpec((1, 1, S), lambda b: (b, 0, 0))],
        out_specs=pl.BlockSpec((1, S, H), lambda b: (b, 0, 0)),
        compiler_params=pltpu.CompilerParams(
            dimension_semantics=("parallel",), vmem_limit_bytes=_VMEM_LIMIT),
    )(qkv, addmask)


# ---------------------------------------------------------------------------
# Mean pool over tokens 1: (exclude CLS), returned in f32
# ---------------------------------------------------------------------------
def _pool_kernel(x_ref, o_ref, *, inv_len):
    x = x_ref[...].astype(jnp.float32)            # (tb, S, H)
    # mean over tokens 1: == (sum over all tokens - token 0) * 1/(S-1);
    # avoids the sublane-unaligned [:, 1:, :] slice.
    o_ref[...] = (jnp.sum(x, axis=1) - x[:, 0, :]) * inv_len


def mean_pool(x, *, tb=8):
    B, S, H = x.shape
    tb = _fit(B, tb)
    return pl.pallas_call(
        functools.partial(_pool_kernel, inv_len=1.0 / float(S - 1)),
        out_shape=jax.ShapeDtypeStruct((B, H), jnp.float32),
        grid=(B // tb,),
        in_specs=[pl.BlockSpec((tb, S, H), lambda i: (i, 0, 0))],
        out_specs=pl.BlockSpec((tb, H), lambda i: (i, 0)),
        compiler_params=pltpu.CompilerParams(
            dimension_semantics=("parallel",), vmem_limit_bytes=_VMEM_LIMIT),
    )(x)


# ---------------------------------------------------------------------------
# Model wrapper (embedding gathers + free reshapes stay in XLA)
# ---------------------------------------------------------------------------
def bert_embedder_forward(params, input_word_ids, input_masks, input_segments):
    B, S = input_word_ids.shape
    H = params["word_emb"].shape[1]
    nH = params["n_heads"]
    dH = H // nH
    scale = 1.0 / float(dH) ** 0.5

    # Embedding lookups stay in plain JAX (gathers); the sum is written back in
    # bf16 (half the HBM traffic) and normalized by a Pallas LayerNorm kernel.
    emb = (jnp.take(params["word_emb"], input_word_ids, axis=0)
           + params["pos_emb"][None, :S, :]
           + jnp.take(params["type_emb"], input_segments, axis=0)
           ).astype(jnp.bfloat16)
    h = layernorm(emb.reshape(B * S, H), params["emb_ln_g"], params["emb_ln_b"])

    # Additive attention mask, one row per batch element: (B, 1, S).
    addmask = ((1.0 - input_masks.astype(jnp.float32)) * -10000.0).reshape(B, 1, S)

    for layer in params["layers"]:
        # Fused Q/K/V projection against the concatenated [H, 3H] weight.
        qkv = linear(h, layer["wqkv"], layer["bqkv"])                       # (B*S, 3H) bf16
        ctx = attention(qkv.reshape(B, S, 3 * H), addmask, nH, dH, scale)   # (B, S, H)  bf16
        # Output projection + residual + LayerNorm fused in the matmul epilogue.
        # TODO(synk): dropout layers are identity at inference (p dropped).
        h = linear(ctx.reshape(B * S, H), layer["wo"], layer["bo"],
                   residual=h, ln=(layer["ln1_g"], layer["ln1_b"]))
        inter = linear(h, layer["w1"], layer["b1"], act="gelu")
        h = linear(inter, layer["w2"], layer["b2"],
                   residual=h, ln=(layer["ln2_g"], layer["ln2_b"]))

    # torch.mean(x[:, 1:, :], dim=1)
    return mean_pool(h.reshape(B, S, H))


# ---------------------------------------------------------------------------
# Deterministic parameter initialization (weights in bf16 for the MXU)
# ---------------------------------------------------------------------------
def init_params(key, *, vocab, max_pos, type_vocab, hidden, n_layers, n_heads,
                intermediate):
    std = 0.02
    keys = iter(jax.random.split(key, 4 + 8 * n_layers))

    def nrm(shape, dtype=jnp.float32):
        return (jax.random.normal(next(keys), shape, jnp.float32) * std).astype(dtype)

    p = {
        "n_heads": n_heads,
        "word_emb": nrm((vocab, hidden)),
        "pos_emb": nrm((max_pos, hidden)),
        "type_emb": nrm((type_vocab, hidden)),
        "emb_ln_g": jnp.ones((hidden,), jnp.float32),
        "emb_ln_b": jnp.zeros((hidden,), jnp.float32),
        "layers": [],
    }
    for _ in range(n_layers):
        wq = nrm((hidden, hidden), jnp.bfloat16)
        wk = nrm((hidden, hidden), jnp.bfloat16)
        wv = nrm((hidden, hidden), jnp.bfloat16)
        p["layers"].append({
            "wqkv": jnp.concatenate([wq, wk, wv], axis=1),      # [H, 3H] bf16
            "bqkv": jnp.zeros((3 * hidden,), jnp.float32),
            "wo": nrm((hidden, hidden), jnp.bfloat16),
            "bo": jnp.zeros((hidden,), jnp.float32),
            "ln1_g": jnp.ones((hidden,), jnp.float32),
            "ln1_b": jnp.zeros((hidden,), jnp.float32),
            "w1": nrm((hidden, intermediate), jnp.bfloat16),
            "b1": jnp.zeros((intermediate,), jnp.float32),
            "w2": nrm((intermediate, hidden), jnp.bfloat16),
            "b2": jnp.zeros((hidden,), jnp.float32),
            "ln2_g": jnp.ones((hidden,), jnp.float32),
            "ln2_b": jnp.zeros((hidden,), jnp.float32),
        })
    return p


# ---------------------------------------------------------------------------
if __name__ == "__main__":
    B, S, H = 2, 8, 32
    N_LAYERS, N_HEADS, INTERMEDIATE = 2, 2, 64
    VOCAB, MAX_POS, TYPE_VOCAB = 100, 16, 2

    key = jax.random.PRNGKey(0)
    pkey, ikey = jax.random.split(key)
    params = init_params(pkey, vocab=VOCAB, max_pos=MAX_POS,
                         type_vocab=TYPE_VOCAB, hidden=H, n_layers=N_LAYERS,
                         n_heads=N_HEADS, intermediate=INTERMEDIATE)

    input_word_ids = jax.random.randint(ikey, (B, S), 0, VOCAB, dtype=jnp.int32)
    input_masks = jnp.ones((B, S), jnp.int32).at[1, -2:].set(0)  # pad last 2 of row 1
    input_segments = jnp.zeros((B, S), jnp.int32)

    # jit the full forward so the XLA-side gathers / reshapes fuse around the
    # Pallas calls (params are closed over; n_heads stays a Python int).
    fwd = jax.jit(lambda ids, m, seg: bert_embedder_forward(params, ids, m, seg))

    out = fwd(input_word_ids, input_masks, input_segments)
    out = jax.block_until_ready(out)
    assert out.shape == (B, H) and out.dtype == jnp.float32
    assert bool(jnp.all(jnp.isfinite(out)))
    print("KERNEL_OK")
</pallas_src>

<mosaic_0001>
module attributes {stable_mosaic.version = 11 : i64} {
  func.func @_ln_kernel(%arg0: i32, %arg1: memref<16x32xbf16, #tpu.memory_space<vmem>>, %arg2: memref<1x32xf32, #tpu.memory_space<vmem>>, %arg3: memref<1x32xf32, #tpu.memory_space<vmem>>, %arg4: memref<16x32xbf16, #tpu.memory_space<vmem>>) attributes {dimension_semantics = [#tpu.dimension_semantics<parallel>], iteration_bounds = array<i64: 1>, scalar_prefetch = 0 : i64, scratch_operands = 0 : i64, tpu.core_type = #tpu.core_type<tc>, window_params = [{transform_indices = @transform_0, window_bounds = array<i64: 16, 32>}, {pipeline_mode = #tpu.pipeline_mode<synchronous>, transform_indices = @transform_1, window_bounds = array<i64: 1, 32>}, {pipeline_mode = #tpu.pipeline_mode<synchronous>, transform_indices = @transform_2, window_bounds = array<i64: 1, 32>}, {transform_indices = @transform_3, window_bounds = array<i64: 16, 32>}]} {
    %c0 = arith.constant 0 : index
    %c0_0 = arith.constant 0 : index
    %0 = vector.load %arg1[%c0, %c0_0] : memref<16x32xbf16, #tpu.memory_space<vmem>>, vector<16x32xbf16>
    %1 = arith.extf %0 : vector<16x32xbf16> to vector<16x32xf32>
    %cst = arith.constant dense<0.000000e+00> : vector<16xf32>
    %2 = vector.multi_reduction <add>, %1, %cst [1] : vector<16x32xf32> to vector<16xf32>
    %3 = vector.shape_cast %2 : vector<16xf32> to vector<16x1xf32>
    %cst_1 = arith.constant 3.200000e+01 : f32
    %4 = vector.broadcast %cst_1 : f32 to vector<16x1xf32>
    %5 = arith.divf %3, %4 : vector<16x1xf32>
    %6 = vector.broadcast %5 : vector<16x1xf32> to vector<16x32xf32>
    %7 = arith.subf %1, %6 : vector<16x32xf32>
    %8 = arith.mulf %7, %7 : vector<16x32xf32>
    %cst_2 = arith.constant dense<0.000000e+00> : vector<16xf32>
    %9 = vector.multi_reduction <add>, %8, %cst_2 [1] : vector<16x32xf32> to vector<16xf32>
    %10 = vector.shape_cast %9 : vector<16xf32> to vector<16x1xf32>
    %cst_3 = arith.constant 3.200000e+01 : f32
    %11 = vector.broadcast %cst_3 : f32 to vector<16x1xf32>
    %12 = arith.divf %10, %11 : vector<16x1xf32>
    %cst_4 = arith.constant 9.99999996E-13 : f32
    %13 = vector.broadcast %cst_4 : f32 to vector<16x1xf32>
    %14 = arith.addf %12, %13 : vector<16x1xf32>
    %15 = math.rsqrt %14 : vector<16x1xf32>
    %16 = vector.broadcast %15 : vector<16x1xf32> to vector<16x32xf32>
    %17 = arith.mulf %7, %16 : vector<16x32xf32>
    %c0_5 = arith.constant 0 : index
    %c0_6 = arith.constant 0 : index
    %18 = vector.load %arg2[%c0_5, %c0_6] : memref<1x32xf32, #tpu.memory_space<vmem>>, vector<1x32xf32>
    %19 = vector.broadcast %18 : vector<1x32xf32> to vector<16x32xf32>
    %20 = arith.mulf %17, %19 : vector<16x32xf32>
    %c0_7 = arith.constant 0 : index
    %c0_8 = arith.constant 0 : index
    %21 = vector.load %arg3[%c0_7, %c0_8] : memref<1x32xf32, #tpu.memory_space<vmem>>, vector<1x32xf32>
    %22 = vector.broadcast %21 : vector<1x32xf32> to vector<16x32xf32>
    %23 = arith.addf %20, %22 : vector<16x32xf32>
    %24 = arith.truncf %23 : vector<16x32xf32> to vector<16x32xbf16>
    %c0_9 = arith.constant 0 : index
    %c0_10 = arith.constant 0 : index
    %25 = vector.load %arg4[%c0_9, %c0_10] : memref<16x32xbf16, #tpu.memory_space<vmem>>, vector<16x32xbf16>
    tpu.vector_store %arg4[%c0_9, %c0_10], %24 {strides = array<i32>} : memref<16x32xbf16, #tpu.memory_space<vmem>>, vector<16x32xbf16>,
    return
  }
  func.func @transform_0(%arg0: i32) -> (i32, i32) {
    %c0_i32 = arith.constant 0 : i32
    %c0_i32_0 = arith.constant 0 : i32
    return %arg0, %c0_i32 : i32, i32
  }
  func.func @transform_1(%arg0: i32) -> (i32, i32) {
    %c0_i32 = arith.constant 0 : i32
    %c0_i32_0 = arith.constant 0 : i32
    %c0_i32_1 = arith.constant 0 : i32
    return %c0_i32, %c0_i32_0 : i32, i32
  }
  func.func @transform_2(%arg0: i32) -> (i32, i32) {
    %c0_i32 = arith.constant 0 : i32
    %c0_i32_0 = arith.constant 0 : i32
    %c0_i32_1 = arith.constant 0 : i32
    return %c0_i32, %c0_i32_0 : i32, i32
  }
  func.func @transform_3(%arg0: i32) -> (i32, i32) {
    %c0_i32 = arith.constant 0 : i32
    %c0_i32_0 = arith.constant 0 : i32
    return %arg0, %c0_i32 : i32, i32
  }
}

module attributes {stable_mosaic.version = 11 : i64} {
  func.func @_linear_kernel(%arg0: i32, %arg1: i32, %arg2: i32, %arg3: memref<16x32xbf16, #tpu.memory_space<vmem>>, %arg4: memref<32x96xbf16, #tpu.memory_space<vmem>>, %arg5: memref<1x96xf32, #tpu.memory_space<vmem>>, %arg6: memref<16x96xbf16, #tpu.memory_space<vmem>>, %arg7: memref<16x96xf32, #tpu.memory_space<vmem>>) attributes {dimension_semantics = [#tpu.dimension_semantics<parallel>, #tpu.dimension_semantics<parallel>, #tpu.dimension_semantics<arbitrary>], iteration_bounds = array<i64: 1, 1, 1>, scalar_prefetch = 0 : i64, scratch_operands = 1 : i64, tpu.core_type = #tpu.core_type<tc>, window_params = [{transform_indices = @transform_0, window_bounds = array<i64: 16, 32>}, {transform_indices = @transform_1, window_bounds = array<i64: 32, 96>}, {transform_indices = @transform_2, window_bounds = array<i64: 1, 96>}, {transform_indices = @transform_3, window_bounds = array<i64: 16, 96>}]} {
    %c0_i32 = arith.constant 0 : i32
    %0 = arith.cmpi eq, %arg2, %c0_i32 : i32
    %1 = arith.extui %0 : i1 to i32
    %c0_i32_0 = arith.constant 0 : i32
    %2 = arith.cmpi ne, %1, %c0_i32_0 : i32
    scf.if %2 {
      %cst_10 = arith.constant 0.000000e+00 : f32
      %12 = vector.broadcast %cst_10 : f32 to vector<16x96xf32>
      %c0_11 = arith.constant 0 : index
      %c0_12 = arith.constant 0 : index
      %13 = vector.load %arg7[%c0_11, %c0_12] : memref<16x96xf32, #tpu.memory_space<vmem>>, vector<16x96xf32>
      tpu.vector_store %arg7[%c0_11, %c0_12], %12 {strides = array<i32>} : memref<16x96xf32, #tpu.memory_space<vmem>>, vector<16x96xf32>,
    } else {
    }
    %c0 = arith.constant 0 : index
    %c0_1 = arith.constant 0 : index
    %3 = vector.load %arg7[%c0, %c0_1] : memref<16x96xf32, #tpu.memory_space<vmem>>, vector<16x96xf32>
    %c0_2 = arith.constant 0 : index
    %c0_3 = arith.constant 0 : index
    %4 = vector.load %arg3[%c0_2, %c0_3] : memref<16x32xbf16, #tpu.memory_space<vmem>>, vector<16x32xbf16>
    %c0_4 = arith.constant 0 : index
    %c0_5 = arith.constant 0 : index
    %5 = vector.load %arg4[%c0_4, %c0_5] : memref<32x96xbf16, #tpu.memory_space<vmem>>, vector<32x96xbf16>
    %cst = arith.constant dense<0.000000e+00> : vector<16x96xf32>
    %6 = tpu.matmul %4, %5, %cst {dimension_numbers = #tpu.dot_dimension_numbers<[1], [0], [0], [1], [0, 0, 1, 1], [], []>} : vector<16x32xbf16>, vector<32x96xbf16>, vector<16x96xf32> -> vector<16x96xf32>
    %7 = arith.addf %3, %6 : vector<16x96xf32>
    %c0_6 = arith.constant 0 : index
    %c0_7 = arith.constant 0 : index
    %8 = vector.load %arg7[%c0_6, %c0_7] : memref<16x96xf32, #tpu.memory_space<vmem>>, vector<16x96xf32>
    tpu.vector_store %arg7[%c0_6, %c0_7], %7 {strides = array<i32>} : memref<16x96xf32, #tpu.memory_space<vmem>>, vector<16x96xf32>,
    %c0_i32_8 = arith.constant 0 : i32
    %9 = arith.cmpi eq, %arg2, %c0_i32_8 : i32
    %10 = arith.extui %9 : i1 to i32
    %c0_i32_9 = arith.constant 0 : i32
    %11 = arith.cmpi ne, %10, %c0_i32_9 : i32
    scf.if %11 {
      %c0_10 = arith.constant 0 : index
      %c0_11 = arith.constant 0 : index
      %12 = vector.load %arg7[%c0_10, %c0_11] : memref<16x96xf32, #tpu.memory_space<vmem>>, vector<16x96xf32>
      %c0_12 = arith.constant 0 : index
      %c0_13 = arith.constant 0 : index
      %13 = vector.load %arg5[%c0_12, %c0_13] : memref<1x96xf32, #tpu.memory_space<vmem>>, vector<1x96xf32>
      %14 = vector.broadcast %13 : vector<1x96xf32> to vector<16x96xf32>
      %15 = arith.addf %12, %14 : vector<16x96xf32>
      %16 = arith.truncf %15 : vector<16x96xf32> to vector<16x96xbf16>
      %c0_14 = arith.constant 0 : index
      %c0_15 = arith.constant 0 : index
      %17 = vector.load %arg6[%c0_14, %c0_15] : memref<16x96xbf16, #tpu.memory_space<vmem>>, vector<16x96xbf16>
      tpu.vector_store %arg6[%c0_14, %c0_15], %16 {strides = array<i32>} : memref<16x96xbf16, #tpu.memory_space<vmem>>, vector<16x96xbf16>,
    } else {
    }
    return
  }
  func.func @transform_0(%arg0: i32, %arg1: i32, %arg2: i32) -> (i32, i32) {
    %c0_i32 = arith.constant 0 : i32
    return %arg0, %arg2 : i32, i32
  }
  func.func @transform_1(%arg0: i32, %arg1: i32, %arg2: i32) -> (i32, i32) {
    %c0_i32 = arith.constant 0 : i32
    return %arg2, %arg1 : i32, i32
  }
  func.func @transform_2(%arg0: i32, %arg1: i32, %arg2: i32) -> (i32, i32) {
    %c0_i32 = arith.constant 0 : i32
    %c0_i32_0 = arith.constant 0 : i32
    return %c0_i32, %arg1 : i32, i32
  }
  func.func @transform_3(%arg0: i32, %arg1: i32, %arg2: i32) -> (i32, i32) {
    %c0_i32 = arith.constant 0 : i32
    return %arg0, %arg1 : i32, i32
  }
}

module attributes {stable_mosaic.version = 11 : i64} {
  func.func @_attn_kernel(%arg0: i32, %arg1: memref<1x8x96xbf16, #tpu.memory_space<vmem>>, %arg2: memref<1x1x8xf32, #tpu.memory_space<vmem>>, %arg3: memref<1x8x32xbf16, #tpu.memory_space<vmem>>) attributes {dimension_semantics = [#tpu.dimension_semantics<parallel>], iteration_bounds = array<i64: 2>, scalar_prefetch = 0 : i64, scratch_operands = 0 : i64, tpu.core_type = #tpu.core_type<tc>, window_params = [{transform_indices = @transform_0, window_bounds = array<i64: 1, 8, 96>}, {transform_indices = @transform_1, window_bounds = array<i64: 1, 1, 8>}, {transform_indices = @transform_2, window_bounds = array<i64: 1, 8, 32>}]} {
    %c0 = arith.constant 0 : index
    %c0_0 = arith.constant 0 : index
    %c0_1 = arith.constant 0 : index
    %0 = vector.load %arg1[%c0, %c0_0, %c0_1] : memref<1x8x96xbf16, #tpu.memory_space<vmem>>, vector<1x8x96xbf16>
    %1 = vector.shape_cast %0 : vector<1x8x96xbf16> to vector<8x96xbf16>
    %c0_2 = arith.constant 0 : index
    %c0_3 = arith.constant 0 : index
    %c0_4 = arith.constant 0 : index
    %2 = vector.load %arg2[%c0_2, %c0_3, %c0_4] : memref<1x1x8xf32, #tpu.memory_space<vmem>>, vector<1x1x8xf32>
    %3 = vector.shape_cast %2 : vector<1x1x8xf32> to vector<1x8xf32>
    %4 = vector.extract_strided_slice %1 {offsets = [0, 0], sizes = [8, 16], strides = [1, 1]} : vector<8x96xbf16> to vector<8x16xbf16>
    %5 = vector.extract_strided_slice %1 {offsets = [0, 32], sizes = [8, 16], strides = [1, 1]} : vector<8x96xbf16> to vector<8x16xbf16>
    %6 = vector.extract_strided_slice %1 {offsets = [0, 64], sizes = [8, 16], strides = [1, 1]} : vector<8x96xbf16> to vector<8x16xbf16>
    %cst = arith.constant dense<0.000000e+00> : vector<8x8xf32>
    %7 = tpu.matmul %4, %5, %cst {dimension_numbers = #tpu.dot_dimension_numbers<[1], [1], [0], [0], [0, 0, 1, 0], [], []>} : vector<8x16xbf16>, vector<8x16xbf16>, vector<8x8xf32> -> vector<8x8xf32>
    %cst_5 = arith.constant 2.500000e-01 : f32
    %8 = vector.broadcast %cst_5 : f32 to vector<8x8xf32>
    %9 = arith.mulf %7, %8 : vector<8x8xf32>
    %10 = vector.broadcast %3 : vector<1x8xf32> to vector<8x8xf32>
    %11 = arith.addf %9, %10 : vector<8x8xf32>
    %cst_6 = arith.constant dense<0xFF800000> : vector<8xf32>
    %12 = vector.multi_reduction <maximumf>, %11, %cst_6 [1] : vector<8x8xf32> to vector<8xf32>
    %13 = vector.shape_cast %12 : vector<8xf32> to vector<8x1xf32>
    %14 = vector.broadcast %13 : vector<8x1xf32> to vector<8x8xf32>
    %15 = arith.subf %11, %14 : vector<8x8xf32>
    %16 = math.exp %15 : vector<8x8xf32>
    %cst_7 = arith.constant dense<0.000000e+00> : vector<8xf32>
    %17 = vector.multi_reduction <add>, %16, %cst_7 [1] : vector<8x8xf32> to vector<8xf32>
    %18 = vector.shape_cast %17 : vector<8xf32> to vector<8x1xf32>
    %19 = tpu.reciprocal %18 {approx = true} : vector<8x1xf32> -> vector<8x1xf32>
    %20 = vector.broadcast %19 : vector<8x1xf32> to vector<8x8xf32>
    %21 = arith.mulf %16, %20 : vector<8x8xf32>
    %22 = arith.truncf %21 : vector<8x8xf32> to vector<8x8xbf16>
    %cst_8 = arith.constant dense<0.000000e+00> : vector<8x16xf32>
    %23 = tpu.matmul %22, %6, %cst_8 {dimension_numbers = #tpu.dot_dimension_numbers<[1], [0], [0], [1], [0, 0, 1, 1], [], []>} : vector<8x8xbf16>, vector<8x16xbf16>, vector<8x16xf32> -> vector<8x16xf32>
    %24 = vector.extract_strided_slice %1 {offsets = [0, 16], sizes = [8, 16], strides = [1, 1]} : vector<8x96xbf16> to vector<8x16xbf16>
    %25 = vector.extract_strided_slice %1 {offsets = [0, 48], sizes = [8, 16], strides = [1, 1]} : vector<8x96xbf16> to vector<8x16xbf16>
    %26 = vector.extract_strided_slice %1 {offsets = [0, 80], sizes = [8, 16], strides = [1, 1]} : vector<8x96xbf16> to vector<8x16xbf16>
    %cst_9 = arith.constant dense<0.000000e+00> : vector<8x8xf32>
    %27 = tpu.matmul %24, %25, %cst_9 {dimension_numbers = #tpu.dot_dimension_numbers<[1], [1], [0], [0], [0, 0, 1, 0], [], []>} : vector<8x16xbf16>, vector<8x16xbf16>, vector<8x8xf32> -> vector<8x8xf32>
    %cst_10 = arith.constant 2.500000e-01 : f32
    %28 = vector.broadcast %cst_10 : f32 to vector<8x8xf32>
    %29 = arith.mulf %27, %28 : vector<8x8xf32>
    %30 = vector.broadcast %3 : vector<1x8xf32> to vector<8x8xf32>
    %31 = arith.addf %29, %30 : vector<8x8xf32>
    %cst_11 = arith.constant dense<0xFF800000> : vector<8xf32>
    %32 = vector.multi_reduction <maximumf>, %31, %cst_11 [1] : vector<8x8xf32> to vector<8xf32>
    %33 = vector.shape_cast %32 : vector<8xf32> to vector<8x1xf32>
    %34 = vector.broadcast %33 : vector<8x1xf32> to vector<8x8xf32>
    %35 = arith.subf %31, %34 : vector<8x8xf32>
    %36 = math.exp %35 : vector<8x8xf32>
    %cst_12 = arith.constant dense<0.000000e+00> : vector<8xf32>
    %37 = vector.multi_reduction <add>, %36, %cst_12 [1] : vector<8x8xf32> to vector<8xf32>
    %38 = vector.shape_cast %37 : vector<8xf32> to vector<8x1xf32>
    %39 = tpu.reciprocal %38 {approx = true} : vector<8x1xf32> -> vector<8x1xf32>
    %40 = vector.broadcast %39 : vector<8x1xf32> to vector<8x8xf32>
    %41 = arith.mulf %36, %40 : vector<8x8xf32>
    %42 = arith.truncf %41 : vector<8x8xf32> to vector<8x8xbf16>
    %cst_13 = arith.constant dense<0.000000e+00> : vector<8x16xf32>
    %43 = tpu.matmul %42, %26, %cst_13 {dimension_numbers = #tpu.dot_dimension_numbers<[1], [0], [0], [1], [0, 0, 1, 1], [], []>} : vector<8x8xbf16>, vector<8x16xbf16>, vector<8x16xf32> -> vector<8x16xf32>
    %44 = tpu.concatenate %23, %43 in 1 : vector<8x16xf32>, vector<8x16xf32> -> vector<8x32xf32>
    %45 = arith.truncf %44 : vector<8x32xf32> to vector<8x32xbf16>
    %c0_14 = arith.constant 0 : index
    %c0_15 = arith.constant 0 : index
    %c0_16 = arith.constant 0 : index
    %46 = vector.load %arg3[%c0_14, %c0_15, %c0_16] : memref<1x8x32xbf16, #tpu.memory_space<vmem>>, vector<1x8x32xbf16>
    %47 = vector.shape_cast %46 : vector<1x8x32xbf16> to vector<8x32xbf16>
    %48 = vector.shape_cast %45 : vector<8x32xbf16> to vector<1x8x32xbf16>
    tpu.vector_store %arg3[%c0_14, %c0_15, %c0_16], %48 {strides = array<i32>} : memref<1x8x32xbf16, #tpu.memory_space<vmem>>, vector<1x8x32xbf16>,
    return
  }
  func.func @transform_0(%arg0: i32) -> (i32, i32, i32) {
    %c0_i32 = arith.constant 0 : i32
    %c0_i32_0 = arith.constant 0 : i32
    %c0_i32_1 = arith.constant 0 : i32
    return %arg0, %c0_i32, %c0_i32_0 : i32, i32, i32
  }
  func.func @transform_1(%arg0: i32) -> (i32, i32, i32) {
    %c0_i32 = arith.constant 0 : i32
    %c0_i32_0 = arith.constant 0 : i32
    %c0_i32_1 = arith.constant 0 : i32
    return %arg0, %c0_i32, %c0_i32_0 : i32, i32, i32
  }
  func.func @transform_2(%arg0: i32) -> (i32, i32, i32) {
    %c0_i32 = arith.constant 0 : i32
    %c0_i32_0 = arith.constant 0 : i32
    %c0_i32_1 = arith.constant 0 : i32
    return %arg0, %c0_i32, %c0_i32_0 : i32, i32, i32
  }
}

module attributes {stable_mosaic.version = 11 : i64} {
  func.func @_linear_kernel(%arg0: i32, %arg1: i32, %arg2: i32, %arg3: memref<16x32xbf16, #tpu.memory_space<vmem>>, %arg4: memref<32x32xbf16, #tpu.memory_space<vmem>>, %arg5: memref<1x32xf32, #tpu.memory_space<vmem>>, %arg6: memref<16x32xbf16, #tpu.memory_space<vmem>>, %arg7: memref<1x32xf32, #tpu.memory_space<vmem>>, %arg8: memref<1x32xf32, #tpu.memory_space<vmem>>, %arg9: memref<16x32xbf16, #tpu.memory_space<vmem>>, %arg10: memref<16x32xf32, #tpu.memory_space<vmem>>) attributes {dimension_semantics = [#tpu.dimension_semantics<parallel>, #tpu.dimension_semantics<parallel>, #tpu.dimension_semantics<arbitrary>], iteration_bounds = array<i64: 1, 1, 1>, scalar_prefetch = 0 : i64, scratch_operands = 1 : i64, tpu.core_type = #tpu.core_type<tc>, window_params = [{transform_indices = @transform_0, window_bounds = array<i64: 16, 32>}, {transform_indices = @transform_1, window_bounds = array<i64: 32, 32>}, {transform_indices = @transform_2, window_bounds = array<i64: 1, 32>}, {transform_indices = @transform_3, window_bounds = array<i64: 16, 32>}, {transform_indices = @transform_4, window_bounds = array<i64: 1, 32>}, {transform_indices = @transform_5, window_bounds = array<i64: 1, 32>}, {transform_indices = @transform_6, window_bounds = array<i64: 16, 32>}]} {
    %c0_i32 = arith.constant 0 : i32
    %0 = arith.cmpi eq, %arg2, %c0_i32 : i32
    %1 = arith.extui %0 : i1 to i32
    %c0_i32_0 = arith.constant 0 : i32
    %2 = arith.cmpi ne, %1, %c0_i32_0 : i32
    scf.if %2 {
      %cst_10 = arith.constant 0.000000e+00 : f32
      %12 = vector.broadcast %cst_10 : f32 to vector<16x32xf32>
      %c0_11 = arith.constant 0 : index
      %c0_12 = arith.constant 0 : index
      %13 = vector.load %arg10[%c0_11, %c0_12] : memref<16x32xf32, #tpu.memory_space<vmem>>, vector<16x32xf32>
      tpu.vector_store %arg10[%c0_11, %c0_12], %12 {strides = array<i32>} : memref<16x32xf32, #tpu.memory_space<vmem>>, vector<16x32xf32>,
    } else {
    }
    %c0 = arith.constant 0 : index
    %c0_1 = arith.constant 0 : index
    %3 = vector.load %arg10[%c0, %c0_1] : memref<16x32xf32, #tpu.memory_space<vmem>>, vector<16x32xf32>
    %c0_2 = arith.constant 0 : index
    %c0_3 = arith.constant 0 : index
    %4 = vector.load %arg3[%c0_2, %c0_3] : memref<16x32xbf16, #tpu.memory_space<vmem>>, vector<16x32xbf16>
    %c0_4 = arith.constant 0 : index
    %c0_5 = arith.constant 0 : index
    %5 = vector.load %arg4[%c0_4, %c0_5] : memref<32x32xbf16, #tpu.memory_space<vmem>>, vector<32x32xbf16>
    %cst = arith.constant dense<0.000000e+00> : vector<16x32xf32>
    %6 = tpu.matmul %4, %5, %cst {dimension_numbers = #tpu.dot_dimension_numbers<[1], [0], [0], [1], [0, 0, 1, 1], [], []>} : vector<16x32xbf16>, vector<32x32xbf16>, vector<16x32xf32> -> vector<16x32xf32>
    %7 = arith.addf %3, %6 : vector<16x32xf32>
    %c0_6 = arith.constant 0 : index
    %c0_7 = arith.constant 0 : index
    %8 = vector.load %arg10[%c0_6, %c0_7] : memref<16x32xf32, #tpu.memory_space<vmem>>, vector<16x32xf32>
    tpu.vector_store %arg10[%c0_6, %c0_7], %7 {strides = array<i32>} : memref<16x32xf32, #tpu.memory_space<vmem>>, vector<16x32xf32>,
    %c0_i32_8 = arith.constant 0 : i32
    %9 = arith.cmpi eq, %arg2, %c0_i32_8 : i32
    %10 = arith.extui %9 : i1 to i32
    %c0_i32_9 = arith.constant 0 : i32
    %11 = arith.cmpi ne, %10, %c0_i32_9 : i32
    scf.if %11 {
      %c0_10 = arith.constant 0 : index
      %c0_11 = arith.constant 0 : index
      %12 = vector.load %arg10[%c0_10, %c0_11] : memref<16x32xf32, #tpu.memory_space<vmem>>, vector<16x32xf32>
      %c0_12 = arith.constant 0 : index
      %c0_13 = arith.constant 0 : index
      %13 = vector.load %arg5[%c0_12, %c0_13] : memref<1x32xf32, #tpu.memory_space<vmem>>, vector<1x32xf32>
      %14 = vector.broadcast %13 : vector<1x32xf32> to vector<16x32xf32>
      %15 = arith.addf %12, %14 : vector<16x32xf32>
      %c0_14 = arith.constant 0 : index
      %c0_15 = arith.constant 0 : index
      %16 = vector.load %arg6[%c0_14, %c0_15] : memref<16x32xbf16, #tpu.memory_space<vmem>>, vector<16x32xbf16>
      %17 = arith.extf %16 : vector<16x32xbf16> to vector<16x32xf32>
      %18 = arith.addf %15, %17 : vector<16x32xf32>
      %cst_16 = arith.constant dense<0.000000e+00> : vector<16xf32>
      %19 = vector.multi_reduction <add>, %18, %cst_16 [1] : vector<16x32xf32> to vector<16xf32>
      %20 = vector.shape_cast %19 : vector<16xf32> to vector<16x1xf32>
      %cst_17 = arith.constant 3.200000e+01 : f32
      %21 = vector.broadcast %cst_17 : f32 to vector<16x1xf32>
      %22 = arith.divf %20, %21 : vector<16x1xf32>
      %23 = vector.broadcast %22 : vector<16x1xf32> to vector<16x32xf32>
      %24 = arith.subf %18, %23 : vector<16x32xf32>
      %25 = arith.mulf %24, %24 : vector<16x32xf32>
      %cst_18 = arith.constant dense<0.000000e+00> : vector<16xf32>
      %26 = vector.multi_reduction <add>, %25, %cst_18 [1] : vector<16x32xf32> to vector<16xf32>
      %27 = vector.shape_cast %26 : vector<16xf32> to vector<16x1xf32>
      %cst_19 = arith.constant 3.200000e+01 : f32
      %28 = vector.broadcast %cst_19 : f32 to vector<16x1xf32>
      %29 = arith.divf %27, %28 : vector<16x1xf32>
      %cst_20 = arith.constant 9.99999996E-13 : f32
      %30 = vector.broadcast %cst_20 : f32 to vector<16x1xf32>
      %31 = arith.addf %29, %30 : vector<16x1xf32>
      %32 = math.rsqrt %31 : vector<16x1xf32>
      %33 = vector.broadcast %32 : vector<16x1xf32> to vector<16x32xf32>
      %34 = arith.mulf %24, %33 : vector<16x32xf32>
      %c0_21 = arith.constant 0 : index
      %c0_22 = arith.constant 0 : index
      %35 = vector.load %arg7[%c0_21, %c0_22] : memref<1x32xf32, #tpu.memory_space<vmem>>, vector<1x32xf32>
      %36 = vector.broadcast %35 : vector<1x32xf32> to vector<16x32xf32>
      %37 = arith.mulf %34, %36 : vector<16x32xf32>
      %c0_23 = arith.constant 0 : index
      %c0_24 = arith.constant 0 : index
      %38 = vector.load %arg8[%c0_23, %c0_24] : memref<1x32xf32, #tpu.memory_space<vmem>>, vector<1x32xf32>
      %39 = vector.broadcast %38 : vector<1x32xf32> to vector<16x32xf32>
      %40 = arith.addf %37, %39 : vector<16x32xf32>
      %41 = arith.truncf %40 : vector<16x32xf32> to vector<16x32xbf16>
      %c0_25 = arith.constant 0 : index
      %c0_26 = arith.constant 0 : index
      %42 = vector.load %arg9[%c0_25, %c0_26] : memref<16x32xbf16, #tpu.memory_space<vmem>>, vector<16x32xbf16>
      tpu.vector_store %arg9[%c0_25, %c0_26], %41 {strides = array<i32>} : memref<16x32xbf16, #tpu.memory_space<vmem>>, vector<16x32xbf16>,
    } else {
    }
    return
  }
  func.func @transform_0(%arg0: i32, %arg1: i32, %arg2: i32) -> (i32, i32) {
    %c0_i32 = arith.constant 0 : i32
    return %arg0, %arg2 : i32, i32
  }
  func.func @transform_1(%arg0: i32, %arg1: i32, %arg2: i32) -> (i32, i32) {
    %c0_i32 = arith.constant 0 : i32
    return %arg2, %arg1 : i32, i32
  }
  func.func @transform_2(%arg0: i32, %arg1: i32, %arg2: i32) -> (i32, i32) {
    %c0_i32 = arith.constant 0 : i32
    %c0_i32_0 = arith.constant 0 : i32
    return %c0_i32, %arg1 : i32, i32
  }
  func.func @transform_3(%arg0: i32, %arg1: i32, %arg2: i32) -> (i32, i32) {
    %c0_i32 = arith.constant 0 : i32
    return %arg0, %arg1 : i32, i32
  }
  func.func @transform_4(%arg0: i32, %arg1: i32, %arg2: i32) -> (i32, i32) {
    %c0_i32 = arith.constant 0 : i32
    %c0_i32_0 = arith.constant 0 : i32
    return %c0_i32, %arg1 : i32, i32
  }
  func.func @transform_5(%arg0: i32, %arg1: i32, %arg2: i32) -> (i32, i32) {
    %c0_i32 = arith.constant 0 : i32
    %c0_i32_0 = arith.constant 0 : i32
    return %c0_i32, %arg1 : i32, i32
  }
  func.func @transform_6(%arg0: i32, %arg1: i32, %arg2: i32) -> (i32, i32) {
    %c0_i32 = arith.constant 0 : i32
    return %arg0, %arg1 : i32, i32
  }
}

module attributes {stable_mosaic.version = 11 : i64} {
  func.func @_linear_kernel(%arg0: i32, %arg1: i32, %arg2: i32, %arg3: memref<16x32xbf16, #tpu.memory_space<vmem>>, %arg4: memref<32x64xbf16, #tpu.memory_space<vmem>>, %arg5: memref<1x64xf32, #tpu.memory_space<vmem>>, %arg6: memref<16x64xbf16, #tpu.memory_space<vmem>>, %arg7: memref<16x64xf32, #tpu.memory_space<vmem>>) attributes {dimension_semantics = [#tpu.dimension_semantics<parallel>, #tpu.dimension_semantics<parallel>, #tpu.dimension_semantics<arbitrary>], iteration_bounds = array<i64: 1, 1, 1>, scalar_prefetch = 0 : i64, scratch_operands = 1 : i64, tpu.core_type = #tpu.core_type<tc>, window_params = [{transform_indices = @transform_0, window_bounds = array<i64: 16, 32>}, {transform_indices = @transform_1, window_bounds = array<i64: 32, 64>}, {transform_indices = @transform_2, window_bounds = array<i64: 1, 64>}, {transform_indices = @transform_3, window_bounds = array<i64: 16, 64>}]} {
    %c0_i32 = arith.constant 0 : i32
    %0 = arith.cmpi eq, %arg2, %c0_i32 : i32
    %1 = arith.extui %0 : i1 to i32
    %c0_i32_0 = arith.constant 0 : i32
    %2 = arith.cmpi ne, %1, %c0_i32_0 : i32
    scf.if %2 {
      %cst_10 = arith.constant 0.000000e+00 : f32
      %12 = vector.broadcast %cst_10 : f32 to vector<16x64xf32>
      %c0_11 = arith.constant 0 : index
      %c0_12 = arith.constant 0 : index
      %13 = vector.load %arg7[%c0_11, %c0_12] : memref<16x64xf32, #tpu.memory_space<vmem>>, vector<16x64xf32>
      tpu.vector_store %arg7[%c0_11, %c0_12], %12 {strides = array<i32>} : memref<16x64xf32, #tpu.memory_space<vmem>>, vector<16x64xf32>,
    } else {
    }
    %c0 = arith.constant 0 : index
    %c0_1 = arith.constant 0 : index
    %3 = vector.load %arg7[%c0, %c0_1] : memref<16x64xf32, #tpu.memory_space<vmem>>, vector<16x64xf32>
    %c0_2 = arith.constant 0 : index
    %c0_3 = arith.constant 0 : index
    %4 = vector.load %arg3[%c0_2, %c0_3] : memref<16x32xbf16, #tpu.memory_space<vmem>>, vector<16x32xbf16>
    %c0_4 = arith.constant 0 : index
    %c0_5 = arith.constant 0 : index
    %5 = vector.load %arg4[%c0_4, %c0_5] : memref<32x64xbf16, #tpu.memory_space<vmem>>, vector<32x64xbf16>
    %cst = arith.constant dense<0.000000e+00> : vector<16x64xf32>
    %6 = tpu.matmul %4, %5, %cst {dimension_numbers = #tpu.dot_dimension_numbers<[1], [0], [0], [1], [0, 0, 1, 1], [], []>} : vector<16x32xbf16>, vector<32x64xbf16>, vector<16x64xf32> -> vector<16x64xf32>
    %7 = arith.addf %3, %6 : vector<16x64xf32>
    %c0_6 = arith.constant 0 : index
    %c0_7 = arith.constant 0 : index
    %8 = vector.load %arg7[%c0_6, %c0_7] : memref<16x64xf32, #tpu.memory_space<vmem>>, vector<16x64xf32>
    tpu.vector_store %arg7[%c0_6, %c0_7], %7 {strides = array<i32>} : memref<16x64xf32, #tpu.memory_space<vmem>>, vector<16x64xf32>,
    %c0_i32_8 = arith.constant 0 : i32
    %9 = arith.cmpi eq, %arg2, %c0_i32_8 : i32
    %10 = arith.extui %9 : i1 to i32
    %c0_i32_9 = arith.constant 0 : i32
    %11 = arith.cmpi ne, %10, %c0_i32_9 : i32
    scf.if %11 {
      %c0_10 = arith.constant 0 : index
      %c0_11 = arith.constant 0 : index
      %12 = vector.load %arg7[%c0_10, %c0_11] : memref<16x64xf32, #tpu.memory_space<vmem>>, vector<16x64xf32>
      %c0_12 = arith.constant 0 : index
      %c0_13 = arith.constant 0 : index
      %13 = vector.load %arg5[%c0_12, %c0_13] : memref<1x64xf32, #tpu.memory_space<vmem>>, vector<1x64xf32>
      %14 = vector.broadcast %13 : vector<1x64xf32> to vector<16x64xf32>
      %15 = arith.addf %12, %14 : vector<16x64xf32>
      %cst_14 = arith.constant 5.000000e-01 : f32
      %16 = vector.broadcast %cst_14 : f32 to vector<16x64xf32>
      %17 = arith.mulf %16, %15 : vector<16x64xf32>
      %cst_15 = arith.constant 4.471500e-02 : f32
      %18 = vector.broadcast %cst_15 : f32 to vector<16x64xf32>
      %19 = arith.mulf %18, %15 : vector<16x64xf32>
      %20 = arith.mulf %19, %15 : vector<16x64xf32>
      %21 = arith.mulf %20, %15 : vector<16x64xf32>
      %22 = arith.addf %15, %21 : vector<16x64xf32>
      %cst_16 = arith.constant 0.797884583 : f32
      %23 = vector.broadcast %cst_16 : f32 to vector<16x64xf32>
      %24 = arith.mulf %23, %22 : vector<16x64xf32>
      %25 = math.tanh %24 : vector<16x64xf32>
      %cst_17 = arith.constant 1.000000e+00 : f32
      %26 = vector.broadcast %cst_17 : f32 to vector<16x64xf32>
      %27 = arith.addf %26, %25 : vector<16x64xf32>
      %28 = arith.mulf %17, %27 : vector<16x64xf32>
      %29 = arith.truncf %28 : vector<16x64xf32> to vector<16x64xbf16>
      %c0_18 = arith.constant 0 : index
      %c0_19 = arith.constant 0 : index
      %30 = vector.load %arg6[%c0_18, %c0_19] : memref<16x64xbf16, #tpu.memory_space<vmem>>, vector<16x64xbf16>
      tpu.vector_store %arg6[%c0_18, %c0_19], %29 {strides = array<i32>} : memref<16x64xbf16, #tpu.memory_space<vmem>>, vector<16x64xbf16>,
    } else {
    }
    return
  }
  func.func @transform_0(%arg0: i32, %arg1: i32, %arg2: i32) -> (i32, i32) {
    %c0_i32 = arith.constant 0 : i32
    return %arg0, %arg2 : i32, i32
  }
  func.func @transform_1(%arg0: i32, %arg1: i32, %arg2: i32) -> (i32, i32) {
    %c0_i32 = arith.constant 0 : i32
    return %arg2, %arg1 : i32, i32
  }
  func.func @transform_2(%arg0: i32, %arg1: i32, %arg2: i32) -> (i32, i32) {
    %c0_i32 = arith.constant 0 : i32
    %c0_i32_0 = arith.constant 0 : i32
    return %c0_i32, %arg1 : i32, i32
  }
  func.func @transform_3(%arg0: i32, %arg1: i32, %arg2: i32) -> (i32, i32) {
    %c0_i32 = arith.constant 0 : i32
    return %arg0, %arg1 : i32, i32
  }
}

module attributes {stable_mosaic.version = 11 : i64} {
  func.func @_linear_kernel(%arg0: i32, %arg1: i32, %arg2: i32, %arg3: memref<16x64xbf16, #tpu.memory_space<vmem>>, %arg4: memref<64x32xbf16, #tpu.memory_space<vmem>>, %arg5: memref<1x32xf32, #tpu.memory_space<vmem>>, %arg6: memref<16x32xbf16, #tpu.memory_space<vmem>>, %arg7: memref<1x32xf32, #tpu.memory_space<vmem>>, %arg8: memref<1x32xf32, #tpu.memory_space<vmem>>, %arg9: memref<16x32xbf16, #tpu.memory_space<vmem>>, %arg10: memref<16x32xf32, #tpu.memory_space<vmem>>) attributes {dimension_semantics = [#tpu.dimension_semantics<parallel>, #tpu.dimension_semantics<parallel>, #tpu.dimension_semantics<arbitrary>], iteration_bounds = array<i64: 1, 1, 1>, scalar_prefetch = 0 : i64, scratch_operands = 1 : i64, tpu.core_type = #tpu.core_type<tc>, window_params = [{transform_indices = @transform_0, window_bounds = array<i64: 16, 64>}, {transform_indices = @transform_1, window_bounds = array<i64: 64, 32>}, {transform_indices = @transform_2, window_bounds = array<i64: 1, 32>}, {transform_indices = @transform_3, window_bounds = array<i64: 16, 32>}, {transform_indices = @transform_4, window_bounds = array<i64: 1, 32>}, {transform_indices = @transform_5, window_bounds = array<i64: 1, 32>}, {transform_indices = @transform_6, window_bounds = array<i64: 16, 32>}]} {
    %c0_i32 = arith.constant 0 : i32
    %0 = arith.cmpi eq, %arg2, %c0_i32 : i32
    %1 = arith.extui %0 : i1 to i32
    %c0_i32_0 = arith.constant 0 : i32
    %2 = arith.cmpi ne, %1, %c0_i32_0 : i32
    scf.if %2 {
      %cst_10 = arith.constant 0.000000e+00 : f32
      %12 = vector.broadcast %cst_10 : f32 to vector<16x32xf32>
      %c0_11 = arith.constant 0 : index
      %c0_12 = arith.constant 0 : index
      %13 = vector.load %arg10[%c0_11, %c0_12] : memref<16x32xf32, #tpu.memory_space<vmem>>, vector<16x32xf32>
      tpu.vector_store %arg10[%c0_11, %c0_12], %12 {strides = array<i32>} : memref<16x32xf32, #tpu.memory_space<vmem>>, vector<16x32xf32>,
    } else {
    }
    %c0 = arith.constant 0 : index
    %c0_1 = arith.constant 0 : index
    %3 = vector.load %arg10[%c0, %c0_1] : memref<16x32xf32, #tpu.memory_space<vmem>>, vector<16x32xf32>
    %c0_2 = arith.constant 0 : index
    %c0_3 = arith.constant 0 : index
    %4 = vector.load %arg3[%c0_2, %c0_3] : memref<16x64xbf16, #tpu.memory_space<vmem>>, vector<16x64xbf16>
    %c0_4 = arith.constant 0 : index
    %c0_5 = arith.constant 0 : index
    %5 = vector.load %arg4[%c0_4, %c0_5] : memref<64x32xbf16, #tpu.memory_space<vmem>>, vector<64x32xbf16>
    %cst = arith.constant dense<0.000000e+00> : vector<16x32xf32>
    %6 = tpu.matmul %4, %5, %cst {dimension_numbers = #tpu.dot_dimension_numbers<[1], [0], [0], [1], [0, 0, 1, 1], [], []>} : vector<16x64xbf16>, vector<64x32xbf16>, vector<16x32xf32> -> vector<16x32xf32>
    %7 = arith.addf %3, %6 : vector<16x32xf32>
    %c0_6 = arith.constant 0 : index
    %c0_7 = arith.constant 0 : index
    %8 = vector.load %arg10[%c0_6, %c0_7] : memref<16x32xf32, #tpu.memory_space<vmem>>, vector<16x32xf32>
    tpu.vector_store %arg10[%c0_6, %c0_7], %7 {strides = array<i32>} : memref<16x32xf32, #tpu.memory_space<vmem>>, vector<16x32xf32>,
    %c0_i32_8 = arith.constant 0 : i32
    %9 = arith.cmpi eq, %arg2, %c0_i32_8 : i32
    %10 = arith.extui %9 : i1 to i32
    %c0_i32_9 = arith.constant 0 : i32
    %11 = arith.cmpi ne, %10, %c0_i32_9 : i32
    scf.if %11 {
      %c0_10 = arith.constant 0 : index
      %c0_11 = arith.constant 0 : index
      %12 = vector.load %arg10[%c0_10, %c0_11] : memref<16x32xf32, #tpu.memory_space<vmem>>, vector<16x32xf32>
      %c0_12 = arith.constant 0 : index
      %c0_13 = arith.constant 0 : index
      %13 = vector.load %arg5[%c0_12, %c0_13] : memref<1x32xf32, #tpu.memory_space<vmem>>, vector<1x32xf32>
      %14 = vector.broadcast %13 : vector<1x32xf32> to vector<16x32xf32>
      %15 = arith.addf %12, %14 : vector<16x32xf32>
      %c0_14 = arith.constant 0 : index
      %c0_15 = arith.constant 0 : index
      %16 = vector.load %arg6[%c0_14, %c0_15] : memref<16x32xbf16, #tpu.memory_space<vmem>>, vector<16x32xbf16>
      %17 = arith.extf %16 : vector<16x32xbf16> to vector<16x32xf32>
      %18 = arith.addf %15, %17 : vector<16x32xf32>
      %cst_16 = arith.constant dense<0.000000e+00> : vector<16xf32>
      %19 = vector.multi_reduction <add>, %18, %cst_16 [1] : vector<16x32xf32> to vector<16xf32>
      %20 = vector.shape_cast %19 : vector<16xf32> to vector<16x1xf32>
      %cst_17 = arith.constant 3.200000e+01 : f32
      %21 = vector.broadcast %cst_17 : f32 to vector<16x1xf32>
      %22 = arith.divf %20, %21 : vector<16x1xf32>
      %23 = vector.broadcast %22 : vector<16x1xf32> to vector<16x32xf32>
      %24 = arith.subf %18, %23 : vector<16x32xf32>
      %25 = arith.mulf %24, %24 : vector<16x32xf32>
      %cst_18 = arith.constant dense<0.000000e+00> : vector<16xf32>
      %26 = vector.multi_reduction <add>, %25, %cst_18 [1] : vector<16x32xf32> to vector<16xf32>
      %27 = vector.shape_cast %26 : vector<16xf32> to vector<16x1xf32>
      %cst_19 = arith.constant 3.200000e+01 : f32
      %28 = vector.broadcast %cst_19 : f32 to vector<16x1xf32>
      %29 = arith.divf %27, %28 : vector<16x1xf32>
      %cst_20 = arith.constant 9.99999996E-13 : f32
      %30 = vector.broadcast %cst_20 : f32 to vector<16x1xf32>
      %31 = arith.addf %29, %30 : vector<16x1xf32>
      %32 = math.rsqrt %31 : vector<16x1xf32>
      %33 = vector.broadcast %32 : vector<16x1xf32> to vector<16x32xf32>
      %34 = arith.mulf %24, %33 : vector<16x32xf32>
      %c0_21 = arith.constant 0 : index
      %c0_22 = arith.constant 0 : index
      %35 = vector.load %arg7[%c0_21, %c0_22] : memref<1x32xf32, #tpu.memory_space<vmem>>, vector<1x32xf32>
      %36 = vector.broadcast %35 : vector<1x32xf32> to vector<16x32xf32>
      %37 = arith.mulf %34, %36 : vector<16x32xf32>
      %c0_23 = arith.constant 0 : index
      %c0_24 = arith.constant 0 : index
      %38 = vector.load %arg8[%c0_23, %c0_24] : memref<1x32xf32, #tpu.memory_space<vmem>>, vector<1x32xf32>
      %39 = vector.broadcast %38 : vector<1x32xf32> to vector<16x32xf32>
      %40 = arith.addf %37, %39 : vector<16x32xf32>
      %41 = arith.truncf %40 : vector<16x32xf32> to vector<16x32xbf16>
      %c0_25 = arith.constant 0 : index
      %c0_26 = arith.constant 0 : index
      %42 = vector.load %arg9[%c0_25, %c0_26] : memref<16x32xbf16, #tpu.memory_space<vmem>>, vector<16x32xbf16>
      tpu.vector_store %arg9[%c0_25, %c0_26], %41 {strides = array<i32>} : memref<16x32xbf16, #tpu.memory_space<vmem>>, vector<16x32xbf16>,
    } else {
    }
    return
  }
  func.func @transform_0(%arg0: i32, %arg1: i32, %arg2: i32) -> (i32, i32) {
    %c0_i32 = arith.constant 0 : i32
    return %arg0, %arg2 : i32, i32
  }
  func.func @transform_1(%arg0: i32, %arg1: i32, %arg2: i32) -> (i32, i32) {
    %c0_i32 = arith.constant 0 : i32
    return %arg2, %arg1 : i32, i32
  }
  func.func @transform_2(%arg0: i32, %arg1: i32, %arg2: i32) -> (i32, i32) {
    %c0_i32 = arith.constant 0 : i32
    %c0_i32_0 = arith.constant 0 : i32
    return %c0_i32, %arg1 : i32, i32
  }
  func.func @transform_3(%arg0: i32, %arg1: i32, %arg2: i32) -> (i32, i32) {
    %c0_i32 = arith.constant 0 : i32
    return %arg0, %arg1 : i32, i32
  }
  func.func @transform_4(%arg0: i32, %arg1: i32, %arg2: i32) -> (i32, i32) {
    %c0_i32 = arith.constant 0 : i32
    %c0_i32_0 = arith.constant 0 : i32
    return %c0_i32, %arg1 : i32, i32
  }
  func.func @transform_5(%arg0: i32, %arg1: i32, %arg2: i32) -> (i32, i32) {
    %c0_i32 = arith.constant 0 : i32
    %c0_i32_0 = arith.constant 0 : i32
    return %c0_i32, %arg1 : i32, i32
  }
  func.func @transform_6(%arg0: i32, %arg1: i32, %arg2: i32) -> (i32, i32) {
    %c0_i32 = arith.constant 0 : i32
    return %arg0, %arg1 : i32, i32
  }
}

module attributes {stable_mosaic.version = 11 : i64} {
  func.func @_pool_kernel(%arg0: i32, %arg1: memref<2x8x32xbf16, #tpu.memory_space<vmem>>, %arg2: memref<2x32xf32, #tpu.memory_space<vmem>>) attributes {dimension_semantics = [#tpu.dimension_semantics<parallel>], iteration_bounds = array<i64: 1>, scalar_prefetch = 0 : i64, scratch_operands = 0 : i64, tpu.core_type = #tpu.core_type<tc>, window_params = [{transform_indices = @transform_0, window_bounds = array<i64: 2, 8, 32>}, {transform_indices = @transform_1, window_bounds = array<i64: 2, 32>}]} {
    %c0 = arith.constant 0 : index
    %c0_0 = arith.constant 0 : index
    %c0_1 = arith.constant 0 : index
    %0 = vector.load %arg1[%c0, %c0_0, %c0_1] : memref<2x8x32xbf16, #tpu.memory_space<vmem>>, vector<2x8x32xbf16>
    %1 = arith.extf %0 : vector<2x8x32xbf16> to vector<2x8x32xf32>
    %cst = arith.constant dense<0.000000e+00> : vector<2x32xf32>
    %2 = vector.multi_reduction <add>, %1, %cst [1] : vector<2x8x32xf32> to vector<2x32xf32>
    %3 = vector.extract_strided_slice %1 {offsets = [0, 0, 0], sizes = [2, 1, 32], strides = [1, 1, 1]} : vector<2x8x32xf32> to vector<2x1x32xf32>
    %4 = vector.shape_cast %3 : vector<2x1x32xf32> to vector<2x32xf32>
    %5 = arith.subf %2, %4 : vector<2x32xf32>
    %cst_2 = arith.constant 0.142857149 : f32
    %6 = vector.broadcast %cst_2 : f32 to vector<2x32xf32>
    %7 = arith.mulf %5, %6 : vector<2x32xf32>
    %c0_3 = arith.constant 0 : index
    %c0_4 = arith.constant 0 : index
    %8 = vector.load %arg2[%c0_3, %c0_4] : memref<2x32xf32, #tpu.memory_space<vmem>>, vector<2x32xf32>
    tpu.vector_store %arg2[%c0_3, %c0_4], %7 {strides = array<i32>} : memref<2x32xf32, #tpu.memory_space<vmem>>, vector<2x32xf32>,
    return
  }
  func.func @transform_0(%arg0: i32) -> (i32, i32, i32) {
    %c0_i32 = arith.constant 0 : i32
    %c0_i32_0 = arith.constant 0 : i32
    %c0_i32_1 = arith.constant 0 : i32
    return %arg0, %c0_i32, %c0_i32_0 : i32, i32, i32
  }
  func.func @transform_1(%arg0: i32) -> (i32, i32) {
    %c0_i32 = arith.constant 0 : i32
    %c0_i32_0 = arith.constant 0 : i32
    return %arg0, %c0_i32 : i32, i32
  }
}

</mosaic_0001>

<llo_original>
// kernel: _lambda_.12
$region0: #{_lambda_.12}
  #allocation0 [shape = 'u32[]', space=smem, size = 0x4, offset = 0x4, fixed_abs, tag = 'smem constant byte address 0x4 - core index']
  #allocation1 [shape = 'u32[144,128]{1,0:T(1,128)}', space=vmem, size = 0x12000, scoped, tag = 'internal scratch']
  %s0 = inlined_call_operand.hbm [shape: bf16[16,32], index: 0, kind: input, shape index: {}]
  %s1 = inlined_call_operand.hbm [shape: f32[1,32], index: 1, kind: input, shape index: {}]
  %s2 = inlined_call_operand.hbm [shape: f32[1,32], index: 2, kind: input, shape index: {}]
  %s3 = inlined_call_operand.hbm [shape: bf16[16,32], index: 3, kind: output, shape index: {}]
  %s4 = sld [smem:[#allocation0]]
  $region34: #{_lambda_.12} parent=0
    _
  %s6 = ssub.s32 1, %s4
  %s7 = scalar_select 0, %s6, %s4
  $region1: #{_lambda_.12} parent=0
    #allocation2 [shape = 'u8[4096]{0}', space=vmem, size = 0x1000, scoped, tag = 'input window, operand 0, single buffered']
    #allocation3 [shape = 's32[1]{0}', space=sflag, size = 0x4, scoped, tag = 'scoped memory for _lambda_.12']
    #allocation4 [shape = 's32[1]{0}', space=sflag, size = 0x4, scoped, tag = 'scoped memory for _lambda_.12']
    #allocation5 [shape = 'u8[512]{0}', space=vmem, size = 0x400, scoped, tag = 'input window, operand 1, single buffered']
    #allocation6 [shape = 's32[1]{0}', space=sflag, size = 0x4, scoped, tag = 'scoped memory for _lambda_.12']
    #allocation7 [shape = 'u8[512]{0}', space=vmem, size = 0x400, scoped, tag = 'input window, operand 2, single buffered']
    #allocation8 [shape = 'u8[4096]{0}', space=vmem, size = 0x1000, scoped, tag = 'output window, operand 0, single buffered']
    %8 = vsyncpa [#allocation3], 0
    %9 = vsyncpa [#allocation6], 0
    %10 = vsyncpa [#allocation4], 0
    // Predicated region
    $region2: #{_lambda_.12} parent=1 // pred_check
      _
    $region3: #{_lambda_.12} parent=1 // pred_check_branch
      %12 = sbr.rel (0) target = $region5
    $region4: #{_lambda_.12} parent=1 // pred_region
      %s14 = ssub.s32 128, 128
      %15 = vsyncadd [#allocation3], %s14
      %s16 = sshll.u32 [#allocation2], 4
      %s17 = int_to_ptr.vmem [resolvable:$true] %s16
      %22 = dma.hbm_to_vmem [thread:$0]  %s0, 128, %s17, [#allocation3], 64, 64, 4
    $region5: #{_lambda_.12} parent=1 // pred_fallthru
      _
    // Predicated region
    $region6: #{_lambda_.12} parent=1 // pred_check
      _
    $region7: #{_lambda_.12} parent=1 // pred_check_branch
      %24 = sbr.rel (0) target = $region9
    $region8: #{_lambda_.12} parent=1 // pred_region
      %s26 = ssub.s32 16, 16
      %27 = vsyncadd [#allocation6], %s26
      %s29 = sshll.u32 [#allocation5], 4
      %s30 = int_to_ptr.vmem [resolvable:$true] %s29
      %32 = dma.hbm_to_vmem [thread:$0]  %s1, 16, %s30, [#allocation6]
    $region9: #{_lambda_.12} parent=1 // pred_fallthru
      _
    // Predicated region
    $region10: #{_lambda_.12} parent=1 // pred_check
      _
    $region11: #{_lambda_.12} parent=1 // pred_check_branch
      %34 = sbr.rel (0) target = $region13
    $region12: #{_lambda_.12} parent=1 // pred_region
      %s36 = ssub.s32 16, 16
      %37 = vsyncadd [#allocation6], %s36
      %s39 = sshll.u32 [#allocation7], 4
      %s40 = int_to_ptr.vmem [resolvable:$true] %s39
      %42 = dma.hbm_to_vmem [thread:$0]  %s2, 16, %s40, [#allocation6]
    $region13: #{_lambda_.12} parent=1 // pred_fallthru
      _
    // Predicated region
    $region14: #{_lambda_.12} parent=1 // pred_check
      _
    $region15: #{_lambda_.12} parent=1 // pred_check_branch
      %44 = sbr.rel (0) target = $region17
    $region16: #{_lambda_.12} parent=1 // pred_region
      %45 = dma.done [#allocation3], 128
    $region17: #{_lambda_.12} parent=1 // pred_fallthru
      _
    // Predicated region
    $region18: #{_lambda_.12} parent=1 // pred_check
      _
    $region19: #{_lambda_.12} parent=1 // pred_check_branch
      %47 = sbr.rel (0) target = $region21
    $region20: #{_lambda_.12} parent=1 // pred_region
      %48 = dma.done [#allocation6], 16
    $region21: #{_lambda_.12} parent=1 // pred_fallthru
      _
    // Predicated region
    $region22: #{_lambda_.12} parent=1 // pred_check
      _
    $region23: #{_lambda_.12} parent=1 // pred_check_branch
      %50 = sbr.rel (0) target = $region25
    $region24: #{_lambda_.12} parent=1 // pred_region
      %51 = dma.done [#allocation6], 16
    $region25: #{_lambda_.12} parent=1 // pred_fallthru
      _
    %v52 = vld [vmem:[#allocation2] sm:$0xf]
    %v53 = vld [vmem:[#allocation2 + $0x4] sm:$0xf]
    %v54 = vunpack.c.l.bf16 %v52
    %v55 = vunpack.c.l.bf16 %v53
    %vm56 = vcmask 261120
    %v57 = vsel %vm56, %v54, 0.0
    %58 = vadd.xlane.f32.xlu0 %v57
    %v59 = vpop.xlane.xlu0 %58
    %v60 = vsel %vm56, %v55, 0.0
    %61 = vadd.xlane.f32.xlu0 %v60
    %v62 = vpop.xlane.xlu0 %61
    %v63 = vrcp.pop 32.0
    %v64 = vmul.f32 %v59, %v63
    %v65 = vmul.f32 %v62, %v63
    %v66 = vsub.f32 %v54, %v64
    %v67 = vsub.f32 %v55, %v65
    %v68 = vmul.f32 %v66, %v66
    %v69 = vmul.f32 %v67, %v67
    %v70 = vsel %vm56, %v68, 0.0
    %71 = vadd.xlane.f32.xlu0 %v70
    %v72 = vpop.xlane.xlu0 %71
    %v73 = vsel %vm56, %v69, 0.0
    %74 = vadd.xlane.f32.xlu0 %v73
    %v75 = vpop.xlane.xlu0 %74
    %v76 = vmul.f32 %v72, %v63
    %v77 = vmul.f32 %v75, %v63
    %v78 = vadd.f32 %v76, 1e-12
    %v79 = vadd.f32 %v77, 1e-12
    %v80 = vrsqrt.pop %v78
    %v81 = vrsqrt.pop %v79
    %v82 = vmul.f32 %v66, %v80
    %v83 = vmul.f32 %v67, %v81
    %v84 = vld [vmem:[#allocation5] sm:$0x1]
    %v86 = vlaneseq
    %v87 = vshrl.u32 %v86, 7
    %v88 = vsub.s32 0, %v87
    %v89 = vrot.slane %v84, %v88
    %v91 = vmul.f32 %v82, %v89
    %v92 = vmul.f32 %v83, %v89
    %v93 = vld [vmem:[#allocation7] sm:$0x1]
    %v95 = vlaneseq
    %v96 = vshrl.u32 %v95, 7
    %v97 = vsub.s32 0, %v96
    %v98 = vrot.slane %v93, %v97
    %v100 = vadd.f32 %v91, %v98
    %v101 = vadd.f32 %v92, %v98
    %v102 = vpack.c.bf16 %v101, %v100
    %v104 = vunpack.c.l.b16 %v102
    %v105 = vunpack.c.h.b16 %v102
    %v106 = vpack.c.b16 %v104, %v104
    %v107 = vpack.c.b16 %v105, %v105
    %vm110 = vcmask 257024
    %111 = vst.msk [vmem:[#allocation8] sm:$0xf] %vm110, %v106
    %112 = vst.msk [vmem:[#allocation8 + $0x4] sm:$0xf] %vm110, %v107
    // Predicated region
    $region26: #{_lambda_.12} parent=1 // pred_check
      _
    $region27: #{_lambda_.12} parent=1 // pred_check_branch
      %114 = sbr.rel (0) target = $region29
    $region28: #{_lambda_.12} parent=1 // pred_region
      %s116 = ssub.s32 128, 128
      %117 = vsyncadd [#allocation4], %s116
      %s118 = sshll.u32 [#allocation8], 4
      %s119 = int_to_ptr.vmem [resolvable:$true] %s118
      %124 = dma.vmem_to_hbm [thread:$0]  %s119, 128, %s3, [#allocation4], 64, 64, 4
    $region29: #{_lambda_.12} parent=1 // pred_fallthru
      _
    // Predicated region
    $region30: #{_lambda_.12} parent=1 // pred_check
      _
    $region31: #{_lambda_.12} parent=1 // pred_check_branch
      %126 = sbr.rel (0) target = $region33
    $region32: #{_lambda_.12} parent=1 // pred_region
      %127 = dma.done [#allocation4], 128
    $region33: #{_lambda_.12} parent=1 // pred_fallthru
      _
    %128 = vsyncpa [#allocation3], 1
    %129 = vsyncpa [#allocation6], 1
    %130 = vsyncpa [#allocation4], 1

// kernel: _lambda_.13
$region0: #{_lambda_.13}
  #allocation0 [shape = 'u32[]', space=smem, size = 0x4, offset = 0x4, fixed_abs, tag = 'smem constant byte address 0x4 - core index']
  #allocation1 [shape = 'u32[144,128]{1,0:T(1,128)}', space=vmem, size = 0x12000, scoped, tag = 'internal scratch']
  #allocation2 [shape = 'f32[16,96]{1,0:T(8,128)}', space=vmem, size = 0x2000, scoped, tag = 'scratch operand']
  %s0 = inlined_call_operand.hbm [shape: bf16[16,32], index: 0, kind: input, shape index: {}]
  %s1 = inlined_call_operand.hbm [shape: bf16[32,96], index: 1, kind: input, shape index: {}]
  %s2 = inlined_call_operand.hbm [shape: f32[1,96], index: 2, kind: input, shape index: {}]
  %s3 = inlined_call_operand.hbm [shape: bf16[16,96], index: 3, kind: output, shape index: {}]
  %s4 = sld [smem:[#allocation0]]
  $region42: #{_lambda_.13} parent=0
    _
  %s6 = ssub.s32 1, %s4
  %s7 = scalar_select 0, %s6, %s4
  $region1: #{_lambda_.13} parent=0
    #allocation3 [shape = 'u8[4096]{0}', space=vmem, size = 0x1000, scoped, tag = 'input window, operand 0, single buffered']
    #allocation4 [shape = 's32[1]{0}', space=sflag, size = 0x4, scoped, tag = 'scoped memory for _lambda_.13']
    #allocation5 [shape = 's32[1]{0}', space=sflag, size = 0x4, scoped, tag = 'scoped memory for _lambda_.13']
    #allocation6 [shape = 'u8[8192]{0}', space=vmem, size = 0x2000, scoped, tag = 'input window, operand 1, single buffered']
    #allocation7 [shape = 's32[1]{0}', space=sflag, size = 0x4, scoped, tag = 'scoped memory for _lambda_.13']
    #allocation8 [shape = 'u8[512]{0}', space=vmem, size = 0x400, scoped, tag = 'input window, operand 2, single buffered']
    #allocation9 [shape = 'u8[4096]{0}', space=vmem, size = 0x1000, scoped, tag = 'output window, operand 0, single buffered']
    %8 = vsyncpa [#allocation4], 0
    %9 = vsyncpa [#allocation7], 0
    %10 = vsyncpa [#allocation5], 0
    // Predicated region
    $region2: #{_lambda_.13} parent=1 // pred_check
      _
    $region3: #{_lambda_.13} parent=1 // pred_check_branch
      %12 = sbr.rel (0) target = $region5
    $region4: #{_lambda_.13} parent=1 // pred_region
      %s14 = ssub.s32 128, 128
      %15 = vsyncadd [#allocation4], %s14
      %s16 = sshll.u32 [#allocation3], 4
      %s17 = int_to_ptr.vmem [resolvable:$true] %s16
      %22 = dma.hbm_to_vmem [thread:$0]  %s0, 128, %s17, [#allocation4], 64, 64, 4
    $region5: #{_lambda_.13} parent=1 // pred_fallthru
      _
    // Predicated region
    $region6: #{_lambda_.13} parent=1 // pred_check
      _
    $region7: #{_lambda_.13} parent=1 // pred_check_branch
      %24 = sbr.rel (0) target = $region9
    $region8: #{_lambda_.13} parent=1 // pred_region
      %s26 = ssub.s32 256, 256
      %27 = vsyncadd [#allocation7], %s26
      %s28 = sshll.u32 [#allocation6], 4
      %s29 = int_to_ptr.vmem [resolvable:$true] %s28
      %34 = dma.hbm_to_vmem [thread:$0]  %s1, 256, %s29, [#allocation7], 64, 64, 4
    $region9: #{_lambda_.13} parent=1 // pred_fallthru
      _
    // Predicated region
    $region10: #{_lambda_.13} parent=1 // pred_check
      _
    $region11: #{_lambda_.13} parent=1 // pred_check_branch
      %36 = sbr.rel (0) target = $region13
    $region12: #{_lambda_.13} parent=1 // pred_region
      %s38 = ssub.s32 16, 16
      %39 = vsyncadd [#allocation7], %s38
      %s41 = sshll.u32 [#allocation8], 4
      %s42 = int_to_ptr.vmem [resolvable:$true] %s41
      %44 = dma.hbm_to_vmem [thread:$0]  %s2, 16, %s42, [#allocation7]
    $region13: #{_lambda_.13} parent=1 // pred_fallthru
      _
    // Predicated region
    $region14: #{_lambda_.13} parent=1 // pred_check
      _
    $region15: #{_lambda_.13} parent=1 // pred_check_branch
      %46 = sbr.rel (0) target = $region17
    $region16: #{_lambda_.13} parent=1 // pred_region
      %47 = dma.done [#allocation4], 128
    $region17: #{_lambda_.13} parent=1 // pred_fallthru
      _
    // Predicated region
    $region18: #{_lambda_.13} parent=1 // pred_check
      _
    $region19: #{_lambda_.13} parent=1 // pred_check_branch
      %49 = sbr.rel (0) target = $region21
    $region20: #{_lambda_.13} parent=1 // pred_region
      %50 = dma.done [#allocation7], 256
    $region21: #{_lambda_.13} parent=1 // pred_fallthru
      _
    // Predicated region
    $region22: #{_lambda_.13} parent=1 // pred_check
      _
    $region23: #{_lambda_.13} parent=1 // pred_check_branch
      %52 = sbr.rel (0) target = $region25
    $region24: #{_lambda_.13} parent=1 // pred_region
      %53 = dma.done [#allocation7], 16
    $region25: #{_lambda_.13} parent=1 // pred_fallthru
      _
    %p55 = scmp.eq.s32.totalorder 0, 0
    // Predicated region
    $region26: #{_lambda_.13} parent=1 // pred_check
      %p56 = pneg %p55
    $region27: #{_lambda_.13} parent=1 // pred_check_branch
      %58 = sbr.rel (%p56) target = $region29
    $region28: #{_lambda_.13} parent=1 // pred_region
      %vm59 = vcmask 785408
      %60 = vst.msk [vmem:[#allocation2] sm:$0xff] %vm59, 0.0
      %61 = vst.msk [vmem:[#allocation2 + $0x8] sm:$0xff] %vm59, 0.0
    $region29: #{_lambda_.13} parent=1 // pred_fallthru
      _
    %v62 = vld [vmem:[#allocation2] sm:$0xff]
    %v63 = vld [vmem:[#allocation2 + $0x8] sm:$0xff]
    %v64 = vld [vmem:[#allocation3] sm:$0xf]
    %v65 = vld [vmem:[#allocation3 + $0x4] sm:$0xf]
    %v66 = vld [vmem:[#allocation6] sm:$0xf]
    %v67 = vld [vmem:[#allocation6 + $0x4] sm:$0xf]
    %v68 = vld [vmem:[#allocation6 + $0x8] sm:$0xf]
    %v69 = vld [vmem:[#allocation6 + $0xc] sm:$0xf]
    %v72 = vunpack.c.l.b16 %v64
    %v73 = vunpack.c.l.b16 %v65
    %v74 = vpack.c.b16 %v73, %v72
    %v79 = vunpack.c.l.b16 %v66
    %v80 = vunpack.c.l.b16 %v67
    %v81 = vunpack.c.l.b16 %v68
    %v82 = vunpack.c.l.b16 %v69
    %v83 = vpack.c.b16 %v80, %v79
    %v84 = vpack.c.b16 %v82, %v81
    %vm87 = vcmask 261120
    %v89 = vsel %vm87, %v74, 0
    %91 = vmatprep.subr.bf16.mxu0 0
    %92 = vmatpush1.bf16.msra.mxu0 %v83
    %93 = vmatprep.subr.bf16.mxu0 0
    %94 = vmatpush1.bf16.msra.mxu0 %v84
    %95 = vmatprep.subr.bf16.mxu0 0
    %96 = vmatpush1.bf16.msra.mxu0 0
    %97 = vmatprep.subr.bf16.mxu0 0
    %98 = vmatpush1.bf16.msra.mxu0 0
    %99 = vmatprep.subr.bf16.mxu0 0
    %100 = vmatpush1.bf16.msra.mxu0 0
    %101 = vmatprep.subr.bf16.mxu0 0
    %102 = vmatpush1.bf16.msra.mxu0 0
    %103 = vmatprep.subr.bf16.mxu0 0
    %104 = vmatpush1.bf16.msra.mxu0 0
    %105 = vmatprep.subr.bf16.mxu0 0
    %106 = vmatpush1.bf16.msra.mxu0 0
    %107 = vmatprep.subr.bf16.mxu0 0
    %108 = vmatpush1.bf16.msra.mxu0 0
    %109 = vmatprep.subr.bf16.mxu0 0
    %110 = vmatpush1.bf16.msra.mxu0 0
    %111 = vmatprep.subr.bf16.mxu0 0
    %112 = vmatpush1.bf16.msra.mxu0 0
    %113 = vmatprep.subr.bf16.mxu0 0
    %114 = vmatpush1.bf16.msra.mxu0 0
    %115 = vmatprep.subr.bf16.mxu0 0
    %116 = vmatpush1.bf16.msra.mxu0 0
    %117 = vmatprep.subr.bf16.mxu0 0
    %118 = vmatpush1.bf16.msra.mxu0 0
    %119 = vmatprep.subr.bf16.mxu0 0
    %120 = vmatpush1.bf16.msra.mxu0 0
    %121 = vmatprep.subr.bf16.mxu0 0
    %122 = vmatpush1.bf16.msra.mxu0 0
    %123 = vmatprep.mubr.bf16.mxu0 0
    %124 = vmatmul.mubr.bf16.gmra.mrb[0].mxu0 %v89
    %v125 = vpop.f32.mrb[0].mxu0
    %v126 = vadd.f32 0.0, %v125
    %v127 = vpop.f32.mrb[0].mxu0
    %v128 = vpop.f32.mrb[0].mxu0
    %v129 = vadd.f32 0.0, %v128
    %v130 = vpop.f32.mrb[0].mxu0
    %131 = vdwg.mxu0
    %v132 = vadd.f32 %v62, %v126
    %v133 = vadd.f32 %v63, %v129
    %vm134 = vcmask 785408
    %135 = vst.msk [vmem:[#allocation2] sm:$0xff] %vm134, %v132
    %136 = vst.msk [vmem:[#allocation2 + $0x8] sm:$0xff] %vm134, %v133
    // Predicated region
    $region30: #{_lambda_.13} parent=1 // pred_check
      %p137 = pneg %p55
    $region31: #{_lambda_.13} parent=1 // pred_check_branch
      %139 = sbr.rel (%p137) target = $region33
    $region32: #{_lambda_.13} parent=1 // pred_region
      %v140 = vld [vmem:[#allocation2] sm:$0xff]
      %v141 = vld [vmem:[#allocation2 + $0x8] sm:$0xff]
      %v142 = vld [vmem:[#allocation8] sm:$0x1]
      %v144 = vlaneseq
      %v145 = vshrl.u32 %v144, 7
      %v146 = vsub.s32 0, %v145
      %v147 = vrot.slane %v142, %v146
      %v149 = vadd.f32 %v140, %v147
      %v150 = vadd.f32 %v141, %v147
      %v151 = vpack.c.bf16 %v150, %v149
      %v153 = vunpack.c.l.b16 %v151
      %v154 = vunpack.c.h.b16 %v151
      %v155 = vpack.c.b16 %v153, %v153
      %v156 = vpack.c.b16 %v154, %v154
      %vm159 = vcmask 781312
      %160 = vst.msk [vmem:[#allocation9] sm:$0xf] %vm159, %v155
      %161 = vst.msk [vmem:[#allocation9 + $0x4] sm:$0xf] %vm159, %v156
    $region33: #{_lambda_.13} parent=1 // pred_fallthru
      _
    // Predicated region
    $region34: #{_lambda_.13} parent=1 // pred_check
      _
    $region35: #{_lambda_.13} parent=1 // pred_check_branch
      %163 = sbr.rel (0) target = $region37
    $region36: #{_lambda_.13} parent=1 // pred_region
      %s165 = ssub.s32 128, 128
      %166 = vsyncadd [#allocation5], %s165
      %s167 = sshll.u32 [#allocation9], 4
      %s168 = int_to_ptr.vmem [resolvable:$true] %s167
      %173 = dma.vmem_to_hbm [thread:$0]  %s168, 128, %s3, [#allocation5], 64, 64, 4
    $region37: #{_lambda_.13} parent=1 // pred_fallthru
      _
    // Predicated region
    $region38: #{_lambda_.13} parent=1 // pred_check
      _
    $region39: #{_lambda_.13} parent=1 // pred_check_branch
      %175 = sbr.rel (0) target = $region41
    $region40: #{_lambda_.13} parent=1 // pred_region
      %176 = dma.done [#allocation5], 128
    $region41: #{_lambda_.13} parent=1 // pred_fallthru
      _
    %177 = vsyncpa [#allocation4], 1
    %178 = vsyncpa [#allocation7], 1
    %179 = vsyncpa [#allocation5], 1

// kernel: _lambda_.14
$region0: #{_lambda_.14}
  #allocation0 [shape = 'u32[]', space=smem, size = 0x4, offset = 0x4, fixed_abs, tag = 'smem constant byte address 0x4 - core index']
  #allocation1 [shape = 'u32[144,128]{1,0:T(1,128)}', space=vmem, size = 0x12000, scoped, tag = 'internal scratch']
  %s0 = inlined_call_operand.hbm [shape: bf16[2,8,96], index: 0, kind: input, shape index: {}]
  %s1 = inlined_call_operand.hbm [shape: f32[2,1,8], index: 1, kind: input, shape index: {}]
  %s2 = inlined_call_operand.hbm [shape: bf16[2,8,32], index: 2, kind: output, shape index: {}]
  %s3 = sld [smem:[#allocation0]]
  $region49: #{_lambda_.14} parent=0
    _
  %s5 = ssub.s32 1, %s3
  %s6 = scalar_select 0, %s5, %s3
  $region1: #{_lambda_.14} parent=0
    #allocation2 [shape = 'u8[4096]{0}', space=vmem, size = 0x1000, scoped, tag = 'input window, operand 0']
    #allocation3 [shape = 's32[2]{0}', space=sflag, size = 0x8, scoped, tag = 'scoped memory for _lambda_.14']
    #allocation4 [shape = 's32[2]{0}', space=sflag, size = 0x8, scoped, tag = 'scoped memory for _lambda_.14']
    #allocation5 [shape = 'u8[1024]{0}', space=vmem, size = 0x400, scoped, tag = 'input window, operand 1']
    #allocation6 [shape = 's32[2]{0}', space=sflag, size = 0x8, scoped, tag = 'scoped memory for _lambda_.14']
    #allocation7 [shape = 'u8[4096]{0}', space=vmem, size = 0x1000, scoped, tag = 'output window, operand 0']
    %7 = vsyncpa [#allocation3], 0
    %s8 = scalar_lea.sflag [#allocation3], 1
    %9 = vsyncpa %s8, 0
    %10 = vsyncpa [#allocation6], 0
    %s11 = scalar_lea.sflag [#allocation6], 1
    %12 = vsyncpa %s11, 0
    %13 = vsyncpa [#allocation4], 0
    %s14 = scalar_lea.sflag [#allocation4], 1
    %15 = vsyncpa %s14, 0
    loop: start=0, step=1, limit=4
    $region2: #{_lambda_.14} parent=1 // loop_pre_header
      _
    $region3: #{_lambda_.14} parent=1 // loop_header
      %s17 = sphi 0, %s21
      %p18 = scmp.ge.s32.totalorder %s17, 4
      %s27 = sphi 0, %s29
      %s30 = sphi 0, %s27
      %s31 = sphi 0, %s30
      %s47 = sphi 0, %s31
      %s53 = sphi 0, %s55
      %s56 = sphi 0, %s53
      %s57 = sphi 0, %s56
      %s73 = sphi 0, %s57
      %s79 = sphi 0, %s81
      %s82 = sphi 0, %s79
      %s83 = sphi 0, %s82
      %s99 = sphi 0, %s83
    $region4: #{_lambda_.14} parent=1 // loop_header_branch
      %20 = sbr.rel (%p18) target = $region8
    $region5: #{_lambda_.14} parent=1 // loop_body
      %s22 = ssub.s32 %s17, 1
      %s23 = ssub.s32 %s17, 2
      %s24 = sadd.s32 %s17, 1
      %s25 = ssub.s32 %s17, %s24
      %p26 = scmp.eq.s32.totalorder %s25, 0
      %s28 = sadd.s32 %s27, 1
      %s29 = scalar_select %p26, %s27, %s28
      %p32 = pneg %p26
      %p33 = scmp.eq.s32.totalorder %s17, 1
      %p34 = por %p32, %p33
      %p35 = scmp.ne.s32.totalorder %s27, %s30
      %p36 = scmp.eq.s32.totalorder %s17, 0
      %p37 = por %p35, %p36
      %p38 = scmp.ne.s32.totalorder %s27, %s30
      %p39 = scmp.eq.s32.totalorder %s22, 1
      %p40 = por %p38, %p39
      %p41 = scmp.ne.s32.totalorder %s30, %s31
      %p42 = scmp.eq.s32.totalorder %s22, 0
      %p43 = por %p41, %p42
      %p44 = scmp.ne.s32.totalorder %s30, %s31
      %p45 = scmp.eq.s32.totalorder %s23, 1
      %p46 = por %p44, %p45
      %p48 = scmp.ne.s32.totalorder %s31, %s47
      %p49 = scmp.eq.s32.totalorder %s23, 0
      %p50 = por %p48, %p49
      %s51 = ssub.s32 %s17, %s24
      %p52 = scmp.eq.s32.totalorder %s51, 0
      %s54 = sadd.s32 %s53, 1
      %s55 = scalar_select %p52, %s53, %s54
      %p58 = pneg %p52
      %p59 = scmp.eq.s32.totalorder %s17, 1
      %p60 = por %p58, %p59
      %p61 = scmp.ne.s32.totalorder %s53, %s56
      %p62 = scmp.eq.s32.totalorder %s17, 0
      %p63 = por %p61, %p62
      %p64 = scmp.ne.s32.totalorder %s53, %s56
      %p65 = scmp.eq.s32.totalorder %s22, 1
      %p66 = por %p64, %p65
      %p67 = scmp.ne.s32.totalorder %s56, %s57
      %p68 = scmp.eq.s32.totalorder %s22, 0
      %p69 = por %p67, %p68
      %p70 = scmp.ne.s32.totalorder %s56, %s57
      %p71 = scmp.eq.s32.totalorder %s23, 1
      %p72 = por %p70, %p71
      %p74 = scmp.ne.s32.totalorder %s57, %s73
      %p75 = scmp.eq.s32.totalorder %s23, 0
      %p76 = por %p74, %p75
      %s77 = ssub.s32 %s17, %s24
      %p78 = scmp.eq.s32.totalorder %s77, 0
      %s80 = sadd.s32 %s79, 1
      %s81 = scalar_select %p78, %s79, %s80
      %p84 = pneg %p78
      %p85 = scmp.eq.s32.totalorder %s17, 1
      %p86 = por %p84, %p85
      %p87 = scmp.ne.s32.totalorder %s79, %s82
      %p88 = scmp.eq.s32.totalorder %s17, 0
      %p89 = por %p87, %p88
      %p90 = scmp.ne.s32.totalorder %s79, %s82
      %p91 = scmp.eq.s32.totalorder %s22, 1
      %p92 = por %p90, %p91
      %p93 = scmp.ne.s32.totalorder %s82, %s83
      %p94 = scmp.eq.s32.totalorder %s22, 0
      %p95 = por %p93, %p94
      %p96 = scmp.ne.s32.totalorder %s82, %s83
      %p97 = scmp.eq.s32.totalorder %s23, 1
      %p98 = por %p96, %p97
      %p100 = scmp.ne.s32.totalorder %s83, %s99
      %p101 = scmp.eq.s32.totalorder %s23, 0
      %p102 = por %p100, %p101
      %p103 = scmp.le.s32.totalorder 1, %s17
      %p104 = scmp.lt.s32.totalorder %s17, 3
      %p105 = pnand %p103, %p104
      %p106 = pneg %p105
      // Predicated region
      $region9: #{_lambda_.14} parent=5 // pred_check
        _
      $region10: #{_lambda_.14} parent=5 // pred_check_branch
        %108 = sbr.rel (%p105) target = $region12
      $region11: #{_lambda_.14} parent=5 // pred_region
        %s109 = ssub.s32 %s17, 1
      $region12: #{_lambda_.14} parent=5 // pred_fallthru
        _
      %p110 = scmp.lt.s32.totalorder %s17, 2
      // Predicated region
      $region13: #{_lambda_.14} parent=5 // pred_check
        %p111 = pneg %p110
      $region14: #{_lambda_.14} parent=5 // pred_check_branch
        %113 = sbr.rel (%p111) target = $region16
      $region15: #{_lambda_.14} parent=5 // pred_region
        // Predicated region
        $region17: #{_lambda_.14} parent=15 // pred_check
          %p114 = pneg %p37
        $region18: #{_lambda_.14} parent=15 // pred_check_branch
          %116 = sbr.rel (%p114) target = $region20
        $region19: #{_lambda_.14} parent=15 // pred_region
          %s117 = sand.u32 %s27, 1
          %s118 = scalar_lea.sflag [#allocation3], %s117
          %s119 = sand.u32 %s27, 1
          %s120 = smul.addr %s119, 4
          %s121 = scalar_lea.vmem [#allocation2], %s120
          %s123 = ssub.s32 64, 64
          %124 = vsyncadd %s118, %s123
          %s125 = smul.addr %s17, 64
          %s126 = scalar_lea.hbm %s0, %s125
          %s128 = sshll.u32 %s121, 4
          %s129 = int_to_ptr.vmem [resolvable:$true] %s128
          %131 = dma.hbm_to_vmem [thread:$0]  %s126, 64, %s129, %s118
        $region20: #{_lambda_.14} parent=15 // pred_fallthru
          _
        // Predicated region
        $region21: #{_lambda_.14} parent=15 // pred_check
          %p132 = pneg %p63
        $region22: #{_lambda_.14} parent=15 // pred_check_branch
          %134 = sbr.rel (%p132) target = $region24
        $region23: #{_lambda_.14} parent=15 // pred_region
          %s135 = sand.u32 %s53, 1
          %s136 = scalar_lea.sflag [#allocation6], %s135
          %s137 = sand.u32 %s53, 1
          %s138 = scalar_lea.vmem [#allocation5], %s137
          %s140 = ssub.s32 16, 16
          %141 = vsyncadd %s136, %s140
          %s142 = smul.addr %s17, 16
          %s143 = scalar_lea.hbm %s1, %s142
          %s145 = sshll.u32 %s138, 4
          %s146 = int_to_ptr.vmem [resolvable:$true] %s145
          %148 = dma.hbm_to_vmem [thread:$0]  %s143, 16, %s146, %s136
        $region24: #{_lambda_.14} parent=15 // pred_fallthru
          _
      $region16: #{_lambda_.14} parent=5 // pred_fallthru
        _
      %p149 = scmp.le.s32.totalorder 1, %s17
      %p150 = scmp.lt.s32.totalorder %s17, 3
      %p151 = pnand %p149, %p150
      %p152 = pneg %p151
      // Predicated region
      $region25: #{_lambda_.14} parent=5 // pred_check
        _
      $region26: #{_lambda_.14} parent=5 // pred_check_branch
        %154 = sbr.rel (%p151) target = $region28
      $region27: #{_lambda_.14} parent=5 // pred_region
        %s155 = ssub.s32 %s17, 1
        %s156 = sand.u32 %s30, 1
        %s157 = scalar_lea.sflag [#allocation3], %s156
        %s158 = sand.u32 %s30, 1
        %s159 = smul.addr %s158, 4
        %s160 = scalar_lea.vmem [#allocation2], %s159
        // Predicated region
        $region29: #{_lambda_.14} parent=27 // pred_check
          %p161 = pneg %p43
        $region30: #{_lambda_.14} parent=27 // pred_check_branch
          %163 = sbr.rel (%p161) target = $region32
        $region31: #{_lambda_.14} parent=27 // pred_region
          %164 = dma.done %s157, 64
        $region32: #{_lambda_.14} parent=27 // pred_fallthru
          _
        %s165 = sand.u32 %s56, 1
        %s166 = scalar_lea.sflag [#allocation6], %s165
        %s167 = sand.u32 %s56, 1
        %s168 = scalar_lea.vmem [#allocation5], %s167
        // Predicated region
        $region33: #{_lambda_.14} parent=27 // pred_check
          %p169 = pneg %p69
        $region34: #{_lambda_.14} parent=27 // pred_check_branch
          %171 = sbr.rel (%p169) target = $region36
        $region35: #{_lambda_.14} parent=27 // pred_region
          %172 = dma.done %s166, 16
        $region36: #{_lambda_.14} parent=27 // pred_fallthru
          _
        %s173 = sand.u32 %s30, 1
        %s174 = scalar_lea.sflag [#allocation3], %s173
        %s175 = sand.u32 %s30, 1
        %s176 = smul.addr %s175, 4
        %s177 = scalar_lea.vmem [#allocation2], %s176
        %p178 = pneg %p43
        %p179 = pneg %p40
        %s180 = sand.u32 %s56, 1
        %s181 = scalar_lea.sflag [#allocation6], %s180
        %s182 = sand.u32 %s56, 1
        %s183 = scalar_lea.vmem [#allocation5], %s182
        %p184 = pneg %p69
        %p185 = pneg %p66
        %p186 = pneg %p95
        %p187 = pneg %p92
        %s188 = sand.u32 %s82, 1
        %s189 = scalar_lea.sflag [#allocation4], %s188
        %s190 = sand.u32 %s82, 1
        %s191 = smul.addr %s190, 4
        %s192 = scalar_lea.vmem [#allocation7], %s191
        %v194 = vld [vmem:[%s160] sm:$0xf]
        %v195 = vld [vmem:[%s168] sm:$0x1]
        %v197 = vunpack.c.l.b16 %v194
        %v198 = vpack.c.b16 %v197, %v197
        %199 = vrot.lane.b32.xlu0 %v198, 96
        %v200 = vpop.permute.xlu0 %199
        %vm201 = vcmask 130048
        %v203 = vsel %vm201, %v194, 0
        %v206 = vsel %vm201, %v200, 0
        %208 = vmatprep.subr.bf16.mxu0 0
        %209 = vmatpush1.bf16.xpose.msra.mxu0 %v206
        %210 = vmatprep.subr.bf16.mxu0 0
        %211 = vmatpush1.bf16.xpose.msra.mxu0 0
        %212 = vmatprep.subr.bf16.mxu0 0
        %213 = vmatpush1.bf16.xpose.msra.mxu0 0
        %214 = vmatprep.subr.bf16.mxu0 0
        %215 = vmatpush1.bf16.xpose.msra.mxu0 0
        %216 = vmatprep.subr.bf16.mxu0 0
        %217 = vmatpush1.bf16.xpose.msra.mxu0 0
        %218 = vmatprep.subr.bf16.mxu0 0
        %219 = vmatpush1.bf16.xpose.msra.mxu0 0
        %220 = vmatprep.subr.bf16.mxu0 0
        %221 = vmatpush1.bf16.xpose.msra.mxu0 0
        %222 = vmatprep.subr.bf16.mxu0 0
        %223 = vmatpush1.bf16.xpose.msra.mxu0 0
        %224 = vmatprep.subr.bf16.mxu0 0
        %225 = vmatpush1.bf16.xpose.msra.mxu0 0
        %226 = vmatprep.subr.bf16.mxu0 0
        %227 = vmatpush1.bf16.xpose.msra.mxu0 0
        %228 = vmatprep.subr.bf16.mxu0 0
        %229 = vmatpush1.bf16.xpose.msra.mxu0 0
        %230 = vmatprep.subr.bf16.mxu0 0
        %231 = vmatpush1.bf16.xpose.msra.mxu0 0
        %232 = vmatprep.subr.bf16.mxu0 0
        %233 = vmatpush1.bf16.xpose.msra.mxu0 0
        %234 = vmatprep.subr.bf16.mxu0 0
        %235 = vmatpush1.bf16.xpose.msra.mxu0 0
        %236 = vmatprep.subr.bf16.mxu0 0
        %237 = vmatpush1.bf16.xpose.msra.mxu0 0
        %238 = vmatprep.subr.bf16.mxu0 0
        %239 = vmatpush1.bf16.xpose.msra.mxu0 0
        %240 = vmatprep.mubr.bf16.mxu0 0
        %241 = vmatmul.mubr.bf16.gmra.mrb[0].mxu0 %v203
        %v242 = vpop.f32.mrb[0].mxu0
        %v243 = vadd.f32 0.0, %v242
        %v244 = vpop.f32.mrb[0].mxu0
        %v245 = vpop.f32.mrb[0].mxu0
        %v246 = vpop.f32.mrb[0].mxu0
        %247 = vdwg.mxu0
        %v248 = vmul.f32 %v243, 0.25
        %v250 = vlaneseq
        %v251 = vshrl.u32 %v250, 7
        %v252 = vsub.s32 0, %v251
        %v253 = vrot.slane %v195, %v252
        %v255 = vadd.f32 %v248, %v253
        %vm256 = vcmask 64512
        %v257 = vsel %vm256, %v255, -inf
        %258 = vmax.xlane.f32.xlu0 %v257
        %v259 = vpop.xlane.xlu0 %258
        %v260 = vsub.f32 %v255, %v259
        %v261 = vmul.f32 %v260, 1.442695
        %v262 = vpow.pop %v261
        %v263 = vsel %vm256, %v262, 0.0
        %264 = vadd.xlane.f32.xlu0 %v263
        %v265 = vpop.xlane.xlu0 %264
        %v266 = vrcp.pop %v265
        %v267 = vmul.f32 %v262, %v266
        %v268 = vpack.c.bf16 %v267, %v267
        %269 = vrot.lane.b32.xlu0 %v198, 64
        %v270 = vpop.permute.xlu0 %269
        %v272 = vsel %vm256, %v268, 0
        %vm274 = vcmask 1043456
        %v276 = vsel %vm274, %v270, 0
        %278 = vmatprep.subr.bf16.mxu0 0
        %279 = vmatpush1.bf16.msra.mxu0 %v276
        %280 = vmatprep.subr.bf16.mxu0 0
        %281 = vmatpush1.bf16.msra.mxu0 0
        %282 = vmatprep.subr.bf16.mxu0 0
        %283 = vmatpush1.bf16.msra.mxu0 0
        %284 = vmatprep.subr.bf16.mxu0 0
        %285 = vmatpush1.bf16.msra.mxu0 0
        %286 = vmatprep.subr.bf16.mxu0 0
        %287 = vmatpush1.bf16.msra.mxu0 0
        %288 = vmatprep.subr.bf16.mxu0 0
        %289 = vmatpush1.bf16.msra.mxu0 0
        %290 = vmatprep.subr.bf16.mxu0 0
        %291 = vmatpush1.bf16.msra.mxu0 0
        %292 = vmatprep.subr.bf16.mxu0 0
        %293 = vmatpush1.bf16.msra.mxu0 0
        %294 = vmatprep.subr.bf16.mxu0 0
        %295 = vmatpush1.bf16.msra.mxu0 0
        %296 = vmatprep.subr.bf16.mxu0 0
        %297 = vmatpush1.bf16.msra.mxu0 0
        %298 = vmatprep.subr.bf16.mxu0 0
        %299 = vmatpush1.bf16.msra.mxu0 0
        %300 = vmatprep.subr.bf16.mxu0 0
        %301 = vmatpush1.bf16.msra.mxu0 0
        %302 = vmatprep.subr.bf16.mxu0 0
        %303 = vmatpush1.bf16.msra.mxu0 0
        %304 = vmatprep.subr.bf16.mxu0 0
        %305 = vmatpush1.bf16.msra.mxu0 0
        %306 = vmatprep.subr.bf16.mxu0 0
        %307 = vmatpush1.bf16.msra.mxu0 0
        %308 = vmatprep.subr.bf16.mxu0 0
        %309 = vmatpush1.bf16.msra.mxu0 0
        %310 = vmatprep.mubr.bf16.mxu0 0
        %311 = vmatmul.mubr.bf16.gmra.mrb[0].mxu0 %v272
        %v312 = vpop.f32.mrb[0].mxu0
        %v313 = vadd.f32 0.0, %v312
        %v314 = vpop.f32.mrb[0].mxu0
        %v315 = vpop.f32.mrb[0].mxu0
        %v316 = vpop.f32.mrb[0].mxu0
        %317 = vdwg.mxu0
        %318 = vrot.lane.b32.xlu0 %v198, 112
        %v319 = vpop.permute.xlu0 %318
        %320 = vrot.lane.b32.xlu0 %v198, 80
        %v321 = vpop.permute.xlu0 %320
        %v323 = vsel %vm201, %v319, 0
        %v326 = vsel %vm201, %v321, 0
        %328 = vmatprep.subr.bf16.mxu0 0
        %329 = vmatpush1.bf16.xpose.msra.mxu0 %v326
        %330 = vmatprep.subr.bf16.mxu0 0
        %331 = vmatpush1.bf16.xpose.msra.mxu0 0
        %332 = vmatprep.subr.bf16.mxu0 0
        %333 = vmatpush1.bf16.xpose.msra.mxu0 0
        %334 = vmatprep.subr.bf16.mxu0 0
        %335 = vmatpush1.bf16.xpose.msra.mxu0 0
        %336 = vmatprep.subr.bf16.mxu0 0
        %337 = vmatpush1.bf16.xpose.msra.mxu0 0
        %338 = vmatprep.subr.bf16.mxu0 0
        %339 = vmatpush1.bf16.xpose.msra.mxu0 0
        %340 = vmatprep.subr.bf16.mxu0 0
        %341 = vmatpush1.bf16.xpose.msra.mxu0 0
        %342 = vmatprep.subr.bf16.mxu0 0
        %343 = vmatpush1.bf16.xpose.msra.mxu0 0
        %344 = vmatprep.subr.bf16.mxu0 0
        %345 = vmatpush1.bf16.xpose.msra.mxu0 0
        %346 = vmatprep.subr.bf16.mxu0 0
        %347 = vmatpush1.bf16.xpose.msra.mxu0 0
        %348 = vmatprep.subr.bf16.mxu0 0
        %349 = vmatpush1.bf16.xpose.msra.mxu0 0
        %350 = vmatprep.subr.bf16.mxu0 0
        %351 = vmatpush1.bf16.xpose.msra.mxu0 0
        %352 = vmatprep.subr.bf16.mxu0 0
        %353 = vmatpush1.bf16.xpose.msra.mxu0 0
        %354 = vmatprep.subr.bf16.mxu0 0
        %355 = vmatpush1.bf16.xpose.msra.mxu0 0
        %356 = vmatprep.subr.bf16.mxu0 0
        %357 = vmatpush1.bf16.xpose.msra.mxu0 0
        %358 = vmatprep.subr.bf16.mxu0 0
        %359 = vmatpush1.bf16.xpose.msra.mxu0 0
        %360 = vmatprep.mubr.bf16.mxu0 0
        %361 = vmatmul.mubr.bf16.gmra.mrb[0].mxu0 %v323
        %v362 = vpop.f32.mrb[0].mxu0
        %v363 = vadd.f32 0.0, %v362
        %v364 = vpop.f32.mrb[0].mxu0
        %v365 = vpop.f32.mrb[0].mxu0
        %v366 = vpop.f32.mrb[0].mxu0
        %367 = vdwg.mxu0
        %v368 = vmul.f32 %v363, 0.25
        %v369 = vadd.f32 %v368, %v253
        %v370 = vsel %vm256, %v369, -inf
        %371 = vmax.xlane.f32.xlu0 %v370
        %v372 = vpop.xlane.xlu0 %371
        %v373 = vsub.f32 %v369, %v372
        %v374 = vmul.f32 %v373, 1.442695
        %v375 = vpow.pop %v374
        %v376 = vsel %vm256, %v375, 0.0
        %377 = vadd.xlane.f32.xlu0 %v376
        %v378 = vpop.xlane.xlu0 %377
        %v379 = vrcp.pop %v378
        %v380 = vmul.f32 %v375, %v379
        %v381 = vpack.c.bf16 %v380, %v380
        %382 = vrot.lane.b32.xlu0 %v198, 48
        %v383 = vpop.permute.xlu0 %382
        %v385 = vsel %vm256, %v381, 0
        %v388 = vsel %vm274, %v383, 0
        %390 = vmatprep.subr.bf16.mxu0 0
        %391 = vmatpush1.bf16.msra.mxu0 %v388
        %392 = vmatprep.subr.bf16.mxu0 0
        %393 = vmatpush1.bf16.msra.mxu0 0
        %394 = vmatprep.subr.bf16.mxu0 0
        %395 = vmatpush1.bf16.msra.mxu0 0
        %396 = vmatprep.subr.bf16.mxu0 0
        %397 = vmatpush1.bf16.msra.mxu0 0
        %398 = vmatprep.subr.bf16.mxu0 0
        %399 = vmatpush1.bf16.msra.mxu0 0
        %400 = vmatprep.subr.bf16.mxu0 0
        %401 = vmatpush1.bf16.msra.mxu0 0
        %402 = vmatprep.subr.bf16.mxu0 0
        %403 = vmatpush1.bf16.msra.mxu0 0
        %404 = vmatprep.subr.bf16.mxu0 0
        %405 = vmatpush1.bf16.msra.mxu0 0
        %406 = vmatprep.subr.bf16.mxu0 0
        %407 = vmatpush1.bf16.msra.mxu0 0
        %408 = vmatprep.subr.bf16.mxu0 0
        %409 = vmatpush1.bf16.msra.mxu0 0
        %410 = vmatprep.subr.bf16.mxu0 0
        %411 = vmatpush1.bf16.msra.mxu0 0
        %412 = vmatprep.subr.bf16.mxu0 0
        %413 = vmatpush1.bf16.msra.mxu0 0
        %414 = vmatprep.subr.bf16.mxu0 0
        %415 = vmatpush1.bf16.msra.mxu0 0
        %416 = vmatprep.subr.bf16.mxu0 0
        %417 = vmatpush1.bf16.msra.mxu0 0
        %418 = vmatprep.subr.bf16.mxu0 0
        %419 = vmatpush1.bf16.msra.mxu0 0
        %420 = vmatprep.subr.bf16.mxu0 0
        %421 = vmatpush1.bf16.msra.mxu0 0
        %422 = vmatprep.mubr.bf16.mxu0 0
        %423 = vmatmul.mubr.bf16.gmra.mrb[0].mxu0 %v385
        %v424 = vpop.f32.mrb[0].mxu0
        %v425 = vadd.f32 0.0, %v424
        %v426 = vpop.f32.mrb[0].mxu0
        %v427 = vpop.f32.mrb[0].mxu0
        %v428 = vpop.f32.mrb[0].mxu0
        %429 = vdwg.mxu0
        %431 = vrot.lane.b32.xlu0 %v425, 16
        %v432 = vpop.permute.xlu0 %431
        %v434 = vsel %vm201, %v313, %v432
        %v435 = vpack.c.bf16 %v434, %v434
        %vm436 = vcmask 257024
        %437 = vst.msk [vmem:[%s192] sm:$0xf] %vm436, %v435
        %s438 = sand.u32 %s82, 1
        %s439 = scalar_lea.sflag [#allocation4], %s438
        %s440 = sand.u32 %s82, 1
        %s441 = smul.addr %s440, 4
        %s442 = scalar_lea.vmem [#allocation7], %s441
        // Predicated region
        $region37: #{_lambda_.14} parent=27 // pred_check
          %p443 = pneg %p92
        $region38: #{_lambda_.14} parent=27 // pred_check_branch
          %445 = sbr.rel (%p443) target = $region40
        $region39: #{_lambda_.14} parent=27 // pred_region
          %s447 = ssub.s32 64, 64
          %448 = vsyncadd %s439, %s447
          %s449 = smul.addr %s22, 64
          %s450 = scalar_lea.hbm %s2, %s449
          %s452 = sshll.u32 %s442, 4
          %s453 = int_to_ptr.vmem [resolvable:$true] %s452
          %455 = dma.vmem_to_hbm [thread:$0]  %s453, 64, %s450, %s439
        $region40: #{_lambda_.14} parent=27 // pred_fallthru
          _
      $region28: #{_lambda_.14} parent=5 // pred_fallthru
        _
      %p456 = scmp.le.s32.totalorder 2, %s17
      // Predicated region
      $region41: #{_lambda_.14} parent=5 // pred_check
        %p457 = pneg %p456
      $region42: #{_lambda_.14} parent=5 // pred_check_branch
        %459 = sbr.rel (%p457) target = $region44
      $region43: #{_lambda_.14} parent=5 // pred_region
        %s460 = ssub.s32 %s17, 2
        // Predicated region
        $region45: #{_lambda_.14} parent=43 // pred_check
          %p461 = pneg %p98
        $region46: #{_lambda_.14} parent=43 // pred_check_branch
          %463 = sbr.rel (%p461) target = $region48
        $region47: #{_lambda_.14} parent=43 // pred_region
          %s464 = sand.u32 %s83, 1
          %s465 = scalar_lea.sflag [#allocation4], %s464
          %s466 = sand.u32 %s83, 1
          %s467 = smul.addr %s466, 4
          %s468 = scalar_lea.vmem [#allocation7], %s467
          %469 = dma.done %s465, 64
        $region48: #{_lambda_.14} parent=43 // pred_fallthru
          _
      $region44: #{_lambda_.14} parent=5 // pred_fallthru
        _
    $region6: #{_lambda_.14} parent=1 // loop_footer
      %s21 = sadd.s32 1, %s17
    $region7: #{_lambda_.14} parent=1 // loop_footer_branch
      %16 = sbr.rel target = $region3
    $region8: #{_lambda_.14} parent=1 // loop_exit
      _
    %470 = vsyncpa [#allocation3], 1
    %s471 = scalar_lea.sflag [#allocation3], 1
    %472 = vsyncpa %s471, 1
    %473 = vsyncpa [#allocation6], 1
    %s474 = scalar_lea.sflag [#allocation6], 1
    %475 = vsyncpa %s474, 1
    %476 = vsyncpa [#allocation4], 1
    %s477 = scalar_lea.sflag [#allocation4], 1
    %478 = vsyncpa %s477, 1

// kernel: _lambda_.15
$region0: #{_lambda_.15}
  #allocation0 [shape = 'u32[]', space=smem, size = 0x4, offset = 0x4, fixed_abs, tag = 'smem constant byte address 0x4 - core index']
  #allocation1 [shape = 'u32[144,128]{1,0:T(1,128)}', space=vmem, size = 0x12000, scoped, tag = 'internal scratch']
  #allocation2 [shape = 'f32[16,32]{1,0:T(8,128)}', space=vmem, size = 0x2000, scoped, tag = 'scratch operand']
  %s0 = inlined_call_operand.hbm [shape: bf16[16,32], index: 0, kind: input, shape index: {}]
  %s1 = inlined_call_operand.hbm [shape: bf16[32,32], index: 1, kind: input, shape index: {}]
  %s2 = inlined_call_operand.hbm [shape: f32[1,32], index: 2, kind: input, shape index: {}, may-alias: {2,5}]
  %s3 = inlined_call_operand.hbm [shape: bf16[16,32], index: 3, kind: input, shape index: {}]
  %s4 = inlined_call_operand.hbm [shape: f32[1,32], index: 4, kind: input, shape index: {}]
  %s5 = inlined_call_operand.hbm [shape: f32[1,32], index: 5, kind: input, shape index: {}, may-alias: {2,5}]
  %s6 = inlined_call_operand.hbm [shape: bf16[16,32], index: 6, kind: output, shape index: {}]
  %s7 = sld [smem:[#allocation0]]
  $region66: #{_lambda_.15} parent=0
    _
  %s9 = ssub.s32 1, %s7
  %s10 = scalar_select 0, %s9, %s7
  $region1: #{_lambda_.15} parent=0
    #allocation3 [shape = 'u8[4096]{0}', space=vmem, size = 0x1000, scoped, tag = 'input window, operand 0, single buffered']
    #allocation4 [shape = 's32[1]{0}', space=sflag, size = 0x4, scoped, tag = 'scoped memory for _lambda_.15']
    #allocation5 [shape = 's32[1]{0}', space=sflag, size = 0x4, scoped, tag = 'scoped memory for _lambda_.15']
    #allocation6 [shape = 'u8[8192]{0}', space=vmem, size = 0x2000, scoped, tag = 'input window, operand 1, single buffered']
    #allocation7 [shape = 's32[1]{0}', space=sflag, size = 0x4, scoped, tag = 'scoped memory for _lambda_.15']
    #allocation8 [shape = 'u8[512]{0}', space=vmem, size = 0x400, scoped, tag = 'input window, operand 2, single buffered']
    #allocation9 [shape = 'u8[4096]{0}', space=vmem, size = 0x1000, scoped, tag = 'input window, operand 3, single buffered']
    #allocation10 [shape = 's32[1]{0}', space=sflag, size = 0x4, scoped, tag = 'scoped memory for _lambda_.15']
    #allocation11 [shape = 'u8[512]{0}', space=vmem, size = 0x400, scoped, tag = 'input window, operand 4, single buffered']
    #allocation12 [shape = 'u8[512]{0}', space=vmem, size = 0x400, scoped, tag = 'input window, operand 5, single buffered']
    #allocation13 [shape = 's32[1]{0}', space=sflag, size = 0x4, scoped, tag = 'scoped memory for _lambda_.15']
    #allocation14 [shape = 'u8[4096]{0}', space=vmem, size = 0x1000, scoped, tag = 'output window, operand 0, single buffered']
    %11 = vsyncpa [#allocation4], 0
    %12 = vsyncpa [#allocation7], 0
    %13 = vsyncpa [#allocation10], 0
    %14 = vsyncpa [#allocation13], 0
    %15 = vsyncpa [#allocation5], 0
    // Predicated region
    $region2: #{_lambda_.15} parent=1 // pred_check
      _
    $region3: #{_lambda_.15} parent=1 // pred_check_branch
      %17 = sbr.rel (0) target = $region5
    $region4: #{_lambda_.15} parent=1 // pred_region
      %s19 = ssub.s32 128, 128
      %20 = vsyncadd [#allocation4], %s19
      %s21 = sshll.u32 [#allocation3], 4
      %s22 = int_to_ptr.vmem [resolvable:$true] %s21
      %27 = dma.hbm_to_vmem [thread:$0]  %s0, 128, %s22, [#allocation4], 64, 64, 4
    $region5: #{_lambda_.15} parent=1 // pred_fallthru
      _
    // Predicated region
    $region6: #{_lambda_.15} parent=1 // pred_check
      _
    $region7: #{_lambda_.15} parent=1 // pred_check_branch
      %29 = sbr.rel (0) target = $region9
    $region8: #{_lambda_.15} parent=1 // pred_region
      %s31 = ssub.s32 256, 256
      %32 = vsyncadd [#allocation7], %s31
      %s33 = sshll.u32 [#allocation6], 4
      %s34 = int_to_ptr.vmem [resolvable:$true] %s33
      %39 = dma.hbm_to_vmem [thread:$0]  %s1, 256, %s34, [#allocation7], 64, 64, 4
    $region9: #{_lambda_.15} parent=1 // pred_fallthru
      _
    // Predicated region
    $region10: #{_lambda_.15} parent=1 // pred_check
      _
    $region11: #{_lambda_.15} parent=1 // pred_check_branch
      %41 = sbr.rel (0) target = $region13
    $region12: #{_lambda_.15} parent=1 // pred_region
      %s43 = ssub.s32 16, 16
      %44 = vsyncadd [#allocation7], %s43
      %s46 = sshll.u32 [#allocation8], 4
      %s47 = int_to_ptr.vmem [resolvable:$true] %s46
      %49 = dma.hbm_to_vmem [thread:$0]  %s2, 16, %s47, [#allocation7]
    $region13: #{_lambda_.15} parent=1 // pred_fallthru
      _
    // Predicated region
    $region14: #{_lambda_.15} parent=1 // pred_check
      _
    $region15: #{_lambda_.15} parent=1 // pred_check_branch
      %51 = sbr.rel (0) target = $region17
    $region16: #{_lambda_.15} parent=1 // pred_region
      %s53 = ssub.s32 128, 128
      %54 = vsyncadd [#allocation10], %s53
      %s55 = sshll.u32 [#allocation9], 4
      %s56 = int_to_ptr.vmem [resolvable:$true] %s55
      %61 = dma.hbm_to_vmem [thread:$0]  %s3, 128, %s56, [#allocation10], 64, 64, 4
    $region17: #{_lambda_.15} parent=1 // pred_fallthru
      _
    // Predicated region
    $region18: #{_lambda_.15} parent=1 // pred_check
      _
    $region19: #{_lambda_.15} parent=1 // pred_check_branch
      %63 = sbr.rel (0) target = $region21
    $region20: #{_lambda_.15} parent=1 // pred_region
      %s65 = ssub.s32 16, 16
      %66 = vsyncadd [#allocation10], %s65
      %s68 = sshll.u32 [#allocation11], 4
      %s69 = int_to_ptr.vmem [resolvable:$true] %s68
      %71 = dma.hbm_to_vmem [thread:$0]  %s4, 16, %s69, [#allocation10]
    $region21: #{_lambda_.15} parent=1 // pred_fallthru
      _
    // Predicated region
    $region22: #{_lambda_.15} parent=1 // pred_check
      _
    $region23: #{_lambda_.15} parent=1 // pred_check_branch
      %73 = sbr.rel (0) target = $region25
    $region24: #{_lambda_.15} parent=1 // pred_region
      %s75 = ssub.s32 16, 16
      %76 = vsyncadd [#allocation13], %s75
      %s78 = sshll.u32 [#allocation12], 4
      %s79 = int_to_ptr.vmem [resolvable:$true] %s78
      %81 = dma.hbm_to_vmem [thread:$0]  %s5, 16, %s79, [#allocation13]
    $region25: #{_lambda_.15} parent=1 // pred_fallthru
      _
    // Predicated region
    $region26: #{_lambda_.15} parent=1 // pred_check
      _
    $region27: #{_lambda_.15} parent=1 // pred_check_branch
      %83 = sbr.rel (0) target = $region29
    $region28: #{_lambda_.15} parent=1 // pred_region
      %84 = dma.done [#allocation4], 128
    $region29: #{_lambda_.15} parent=1 // pred_fallthru
      _
    // Predicated region
    $region30: #{_lambda_.15} parent=1 // pred_check
      _
    $region31: #{_lambda_.15} parent=1 // pred_check_branch
      %86 = sbr.rel (0) target = $region33
    $region32: #{_lambda_.15} parent=1 // pred_region
      %87 = dma.done [#allocation7], 256
    $region33: #{_lambda_.15} parent=1 // pred_fallthru
      _
    // Predicated region
    $region34: #{_lambda_.15} parent=1 // pred_check
      _
    $region35: #{_lambda_.15} parent=1 // pred_check_branch
      %89 = sbr.rel (0) target = $region37
    $region36: #{_lambda_.15} parent=1 // pred_region
      %90 = dma.done [#allocation7], 16
    $region37: #{_lambda_.15} parent=1 // pred_fallthru
      _
    // Predicated region
    $region38: #{_lambda_.15} parent=1 // pred_check
      _
    $region39: #{_lambda_.15} parent=1 // pred_check_branch
      %92 = sbr.rel (0) target = $region41
    $region40: #{_lambda_.15} parent=1 // pred_region
      %93 = dma.done [#allocation10], 128
    $region41: #{_lambda_.15} parent=1 // pred_fallthru
      _
    // Predicated region
    $region42: #{_lambda_.15} parent=1 // pred_check
      _
    $region43: #{_lambda_.15} parent=1 // pred_check_branch
      %95 = sbr.rel (0) target = $region45
    $region44: #{_lambda_.15} parent=1 // pred_region
      %96 = dma.done [#allocation10], 16
    $region45: #{_lambda_.15} parent=1 // pred_fallthru
      _
    // Predicated region
    $region46: #{_lambda_.15} parent=1 // pred_check
      _
    $region47: #{_lambda_.15} parent=1 // pred_check_branch
      %98 = sbr.rel (0) target = $region49
    $region48: #{_lambda_.15} parent=1 // pred_region
      %99 = dma.done [#allocation13], 16
    $region49: #{_lambda_.15} parent=1 // pred_fallthru
      _
    %p101 = scmp.eq.s32.totalorder 0, 0
    // Predicated region
    $region50: #{_lambda_.15} parent=1 // pred_check
      %p102 = pneg %p101
    $region51: #{_lambda_.15} parent=1 // pred_check_branch
      %104 = sbr.rel (%p102) target = $region53
    $region52: #{_lambda_.15} parent=1 // pred_region
      %vm105 = vcmask 261120
      %106 = vst.msk [vmem:[#allocation2] sm:$0xff] %vm105, 0.0
      %107 = vst.msk [vmem:[#allocation2 + $0x8] sm:$0xff] %vm105, 0.0
    $region53: #{_lambda_.15} parent=1 // pred_fallthru
      _
    %v108 = vld [vmem:[#allocation2] sm:$0xff]
    %v109 = vld [vmem:[#allocation2 + $0x8] sm:$0xff]
    %v110 = vld [vmem:[#allocation3] sm:$0xf]
    %v111 = vld [vmem:[#allocation3 + $0x4] sm:$0xf]
    %v112 = vld [vmem:[#allocation6] sm:$0xf]
    %v113 = vld [vmem:[#allocation6 + $0x4] sm:$0xf]
    %v114 = vld [vmem:[#allocation6 + $0x8] sm:$0xf]
    %v115 = vld [vmem:[#allocation6 + $0xc] sm:$0xf]
    %v118 = vunpack.c.l.b16 %v110
    %v119 = vunpack.c.l.b16 %v111
    %v120 = vpack.c.b16 %v119, %v118
    %v125 = vunpack.c.l.b16 %v112
    %v126 = vunpack.c.l.b16 %v113
    %v127 = vunpack.c.l.b16 %v114
    %v128 = vunpack.c.l.b16 %v115
    %v129 = vpack.c.b16 %v126, %v125
    %v130 = vpack.c.b16 %v128, %v127
    %vm133 = vcmask 261120
    %v135 = vsel %vm133, %v120, 0
    %137 = vmatprep.subr.bf16.mxu0 0
    %138 = vmatpush1.bf16.msra.mxu0 %v129
    %139 = vmatprep.subr.bf16.mxu0 0
    %140 = vmatpush1.bf16.msra.mxu0 %v130
    %141 = vmatprep.subr.bf16.mxu0 0
    %142 = vmatpush1.bf16.msra.mxu0 0
    %143 = vmatprep.subr.bf16.mxu0 0
    %144 = vmatpush1.bf16.msra.mxu0 0
    %145 = vmatprep.subr.bf16.mxu0 0
    %146 = vmatpush1.bf16.msra.mxu0 0
    %147 = vmatprep.subr.bf16.mxu0 0
    %148 = vmatpush1.bf16.msra.mxu0 0
    %149 = vmatprep.subr.bf16.mxu0 0
    %150 = vmatpush1.bf16.msra.mxu0 0
    %151 = vmatprep.subr.bf16.mxu0 0
    %152 = vmatpush1.bf16.msra.mxu0 0
    %153 = vmatprep.subr.bf16.mxu0 0
    %154 = vmatpush1.bf16.msra.mxu0 0
    %155 = vmatprep.subr.bf16.mxu0 0
    %156 = vmatpush1.bf16.msra.mxu0 0
    %157 = vmatprep.subr.bf16.mxu0 0
    %158 = vmatpush1.bf16.msra.mxu0 0
    %159 = vmatprep.subr.bf16.mxu0 0
    %160 = vmatpush1.bf16.msra.mxu0 0
    %161 = vmatprep.subr.bf16.mxu0 0
    %162 = vmatpush1.bf16.msra.mxu0 0
    %163 = vmatprep.subr.bf16.mxu0 0
    %164 = vmatpush1.bf16.msra.mxu0 0
    %165 = vmatprep.subr.bf16.mxu0 0
    %166 = vmatpush1.bf16.msra.mxu0 0
    %167 = vmatprep.subr.bf16.mxu0 0
    %168 = vmatpush1.bf16.msra.mxu0 0
    %169 = vmatprep.mubr.bf16.mxu0 0
    %170 = vmatmul.mubr.bf16.gmra.mrb[0].mxu0 %v135
    %v171 = vpop.f32.mrb[0].mxu0
    %v172 = vadd.f32 0.0, %v171
    %v173 = vpop.f32.mrb[0].mxu0
    %v174 = vpop.f32.mrb[0].mxu0
    %v175 = vadd.f32 0.0, %v174
    %v176 = vpop.f32.mrb[0].mxu0
    %177 = vdwg.mxu0
    %v178 = vadd.f32 %v108, %v172
    %v179 = vadd.f32 %v109, %v175
    %180 = vst.msk [vmem:[#allocation2] sm:$0xff] %vm133, %v178
    %181 = vst.msk [vmem:[#allocation2 + $0x8] sm:$0xff] %vm133, %v179
    // Predicated region
    $region54: #{_lambda_.15} parent=1 // pred_check
      %p182 = pneg %p101
    $region55: #{_lambda_.15} parent=1 // pred_check_branch
      %184 = sbr.rel (%p182) target = $region57
    $region56: #{_lambda_.15} parent=1 // pred_region
      %v185 = vld [vmem:[#allocation2] sm:$0xff]
      %v186 = vld [vmem:[#allocation2 + $0x8] sm:$0xff]
      %v187 = vld [vmem:[#allocation8] sm:$0x1]
      %v189 = vlaneseq
      %v190 = vshrl.u32 %v189, 7
      %v191 = vsub.s32 0, %v190
      %v192 = vrot.slane %v187, %v191
      %v194 = vadd.f32 %v185, %v192
      %v195 = vadd.f32 %v186, %v192
      %v196 = vld [vmem:[#allocation9] sm:$0xf]
      %v197 = vld [vmem:[#allocation9 + $0x4] sm:$0xf]
      %v198 = vunpack.c.l.bf16 %v196
      %v199 = vunpack.c.l.bf16 %v197
      %v200 = vadd.f32 %v194, %v198
      %v201 = vadd.f32 %v195, %v199
      %v202 = vsel %vm133, %v200, 0.0
      %203 = vadd.xlane.f32.xlu0 %v202
      %v204 = vpop.xlane.xlu0 %203
      %v205 = vsel %vm133, %v201, 0.0
      %206 = vadd.xlane.f32.xlu0 %v205
      %v207 = vpop.xlane.xlu0 %206
      %v208 = vrcp.pop 32.0
      %v209 = vmul.f32 %v204, %v208
      %v210 = vmul.f32 %v207, %v208
      %v211 = vsub.f32 %v200, %v209
      %v212 = vsub.f32 %v201, %v210
      %v213 = vmul.f32 %v211, %v211
      %v214 = vmul.f32 %v212, %v212
      %v215 = vsel %vm133, %v213, 0.0
      %216 = vadd.xlane.f32.xlu0 %v215
      %v217 = vpop.xlane.xlu0 %216
      %v218 = vsel %vm133, %v214, 0.0
      %219 = vadd.xlane.f32.xlu0 %v218
      %v220 = vpop.xlane.xlu0 %219
      %v221 = vmul.f32 %v217, %v208
      %v222 = vmul.f32 %v220, %v208
      %v223 = vadd.f32 %v221, 1e-12
      %v224 = vadd.f32 %v222, 1e-12
      %v225 = vrsqrt.pop %v223
      %v226 = vrsqrt.pop %v224
      %v227 = vmul.f32 %v211, %v225
      %v228 = vmul.f32 %v212, %v226
      %v229 = vld [vmem:[#allocation11] sm:$0x1]
      %v231 = vlaneseq
      %v232 = vshrl.u32 %v231, 7
      %v233 = vsub.s32 0, %v232
      %v234 = vrot.slane %v229, %v233
      %v236 = vmul.f32 %v227, %v234
      %v237 = vmul.f32 %v228, %v234
      %v238 = vld [vmem:[#allocation12] sm:$0x1]
      %v240 = vlaneseq
      %v241 = vshrl.u32 %v240, 7
      %v242 = vsub.s32 0, %v241
      %v243 = vrot.slane %v238, %v242
      %v245 = vadd.f32 %v236, %v243
      %v246 = vadd.f32 %v237, %v243
      %v247 = vpack.c.bf16 %v246, %v245
      %v249 = vunpack.c.l.b16 %v247
      %v250 = vunpack.c.h.b16 %v247
      %v251 = vpack.c.b16 %v249, %v249
      %v252 = vpack.c.b16 %v250, %v250
      %vm255 = vcmask 257024
      %256 = vst.msk [vmem:[#allocation14] sm:$0xf] %vm255, %v251
      %257 = vst.msk [vmem:[#allocation14 + $0x4] sm:$0xf] %vm255, %v252
    $region57: #{_lambda_.15} parent=1 // pred_fallthru
      _
    // Predicated region
    $region58: #{_lambda_.15} parent=1 // pred_check
      _
    $region59: #{_lambda_.15} parent=1 // pred_check_branch
      %259 = sbr.rel (0) target = $region61
    $region60: #{_lambda_.15} parent=1 // pred_region
      %s261 = ssub.s32 128, 128
      %262 = vsyncadd [#allocation5], %s261
      %s263 = sshll.u32 [#allocation14], 4
      %s264 = int_to_ptr.vmem [resolvable:$true] %s263
      %269 = dma.vmem_to_hbm [thread:$0]  %s264, 128, %s6, [#allocation5], 64, 64, 4
    $region61: #{_lambda_.15} parent=1 // pred_fallthru
      _
    // Predicated region
    $region62: #{_lambda_.15} parent=1 // pred_check
      _
    $region63: #{_lambda_.15} parent=1 // pred_check_branch
      %271 = sbr.rel (0) target = $region65
    $region64: #{_lambda_.15} parent=1 // pred_region
      %272 = dma.done [#allocation5], 128
    $region65: #{_lambda_.15} parent=1 // pred_fallthru
      _
    %273 = vsyncpa [#allocation4], 1
    %274 = vsyncpa [#allocation7], 1
    %275 = vsyncpa [#allocation10], 1
    %276 = vsyncpa [#allocation13], 1
    %277 = vsyncpa [#allocation5], 1

// kernel: _lambda_.16
$region0: #{_lambda_.16}
  #allocation0 [shape = 'u32[]', space=smem, size = 0x4, offset = 0x4, fixed_abs, tag = 'smem constant byte address 0x4 - core index']
  #allocation1 [shape = 'u32[144,128]{1,0:T(1,128)}', space=vmem, size = 0x12000, scoped, tag = 'internal scratch']
  #allocation2 [shape = 'f32[16,64]{1,0:T(8,128)}', space=vmem, size = 0x2000, scoped, tag = 'scratch operand']
  %s0 = inlined_call_operand.hbm [shape: bf16[16,32], index: 0, kind: input, shape index: {}]
  %s1 = inlined_call_operand.hbm [shape: bf16[32,64], index: 1, kind: input, shape index: {}]
  %s2 = inlined_call_operand.hbm [shape: f32[1,64], index: 2, kind: input, shape index: {}]
  %s3 = inlined_call_operand.hbm [shape: bf16[16,64], index: 3, kind: output, shape index: {}]
  %s4 = sld [smem:[#allocation0]]
  $region42: #{_lambda_.16} parent=0
    _
  %s6 = ssub.s32 1, %s4
  %s7 = scalar_select 0, %s6, %s4
  $region1: #{_lambda_.16} parent=0
    #allocation3 [shape = 'u8[4096]{0}', space=vmem, size = 0x1000, scoped, tag = 'input window, operand 0, single buffered']
    #allocation4 [shape = 's32[1]{0}', space=sflag, size = 0x4, scoped, tag = 'scoped memory for _lambda_.16']
    #allocation5 [shape = 's32[1]{0}', space=sflag, size = 0x4, scoped, tag = 'scoped memory for _lambda_.16']
    #allocation6 [shape = 'u8[8192]{0}', space=vmem, size = 0x2000, scoped, tag = 'input window, operand 1, single buffered']
    #allocation7 [shape = 's32[1]{0}', space=sflag, size = 0x4, scoped, tag = 'scoped memory for _lambda_.16']
    #allocation8 [shape = 'u8[512]{0}', space=vmem, size = 0x400, scoped, tag = 'input window, operand 2, single buffered']
    #allocation9 [shape = 'u8[4096]{0}', space=vmem, size = 0x1000, scoped, tag = 'output window, operand 0, single buffered']
    %8 = vsyncpa [#allocation4], 0
    %9 = vsyncpa [#allocation7], 0
    %10 = vsyncpa [#allocation5], 0
    // Predicated region
    $region2: #{_lambda_.16} parent=1 // pred_check
      _
    $region3: #{_lambda_.16} parent=1 // pred_check_branch
      %12 = sbr.rel (0) target = $region5
    $region4: #{_lambda_.16} parent=1 // pred_region
      %s14 = ssub.s32 128, 128
      %15 = vsyncadd [#allocation4], %s14
      %s16 = sshll.u32 [#allocation3], 4
      %s17 = int_to_ptr.vmem [resolvable:$true] %s16
      %22 = dma.hbm_to_vmem [thread:$0]  %s0, 128, %s17, [#allocation4], 64, 64, 4
    $region5: #{_lambda_.16} parent=1 // pred_fallthru
      _
    // Predicated region
    $region6: #{_lambda_.16} parent=1 // pred_check
      _
    $region7: #{_lambda_.16} parent=1 // pred_check_branch
      %24 = sbr.rel (0) target = $region9
    $region8: #{_lambda_.16} parent=1 // pred_region
      %s26 = ssub.s32 256, 256
      %27 = vsyncadd [#allocation7], %s26
      %s28 = sshll.u32 [#allocation6], 4
      %s29 = int_to_ptr.vmem [resolvable:$true] %s28
      %34 = dma.hbm_to_vmem [thread:$0]  %s1, 256, %s29, [#allocation7], 64, 64, 4
    $region9: #{_lambda_.16} parent=1 // pred_fallthru
      _
    // Predicated region
    $region10: #{_lambda_.16} parent=1 // pred_check
      _
    $region11: #{_lambda_.16} parent=1 // pred_check_branch
      %36 = sbr.rel (0) target = $region13
    $region12: #{_lambda_.16} parent=1 // pred_region
      %s38 = ssub.s32 16, 16
      %39 = vsyncadd [#allocation7], %s38
      %s41 = sshll.u32 [#allocation8], 4
      %s42 = int_to_ptr.vmem [resolvable:$true] %s41
      %44 = dma.hbm_to_vmem [thread:$0]  %s2, 16, %s42, [#allocation7]
    $region13: #{_lambda_.16} parent=1 // pred_fallthru
      _
    // Predicated region
    $region14: #{_lambda_.16} parent=1 // pred_check
      _
    $region15: #{_lambda_.16} parent=1 // pred_check_branch
      %46 = sbr.rel (0) target = $region17
    $region16: #{_lambda_.16} parent=1 // pred_region
      %47 = dma.done [#allocation4], 128
    $region17: #{_lambda_.16} parent=1 // pred_fallthru
      _
    // Predicated region
    $region18: #{_lambda_.16} parent=1 // pred_check
      _
    $region19: #{_lambda_.16} parent=1 // pred_check_branch
      %49 = sbr.rel (0) target = $region21
    $region20: #{_lambda_.16} parent=1 // pred_region
      %50 = dma.done [#allocation7], 256
    $region21: #{_lambda_.16} parent=1 // pred_fallthru
      _
    // Predicated region
    $region22: #{_lambda_.16} parent=1 // pred_check
      _
    $region23: #{_lambda_.16} parent=1 // pred_check_branch
      %52 = sbr.rel (0) target = $region25
    $region24: #{_lambda_.16} parent=1 // pred_region
      %53 = dma.done [#allocation7], 16
    $region25: #{_lambda_.16} parent=1 // pred_fallthru
      _
    %p55 = scmp.eq.s32.totalorder 0, 0
    // Predicated region
    $region26: #{_lambda_.16} parent=1 // pred_check
      %p56 = pneg %p55
    $region27: #{_lambda_.16} parent=1 // pred_check_branch
      %58 = sbr.rel (%p56) target = $region29
    $region28: #{_lambda_.16} parent=1 // pred_region
      %vm59 = vcmask 523264
      %60 = vst.msk [vmem:[#allocation2] sm:$0xff] %vm59, 0.0
      %61 = vst.msk [vmem:[#allocation2 + $0x8] sm:$0xff] %vm59, 0.0
    $region29: #{_lambda_.16} parent=1 // pred_fallthru
      _
    %v62 = vld [vmem:[#allocation2] sm:$0xff]
    %v63 = vld [vmem:[#allocation2 + $0x8] sm:$0xff]
    %v64 = vld [vmem:[#allocation3] sm:$0xf]
    %v65 = vld [vmem:[#allocation3 + $0x4] sm:$0xf]
    %v66 = vld [vmem:[#allocation6] sm:$0xf]
    %v67 = vld [vmem:[#allocation6 + $0x4] sm:$0xf]
    %v68 = vld [vmem:[#allocation6 + $0x8] sm:$0xf]
    %v69 = vld [vmem:[#allocation6 + $0xc] sm:$0xf]
    %v72 = vunpack.c.l.b16 %v64
    %v73 = vunpack.c.l.b16 %v65
    %v74 = vpack.c.b16 %v73, %v72
    %v79 = vunpack.c.l.b16 %v66
    %v80 = vunpack.c.l.b16 %v67
    %v81 = vunpack.c.l.b16 %v68
    %v82 = vunpack.c.l.b16 %v69
    %v83 = vpack.c.b16 %v80, %v79
    %v84 = vpack.c.b16 %v82, %v81
    %vm87 = vcmask 261120
    %v89 = vsel %vm87, %v74, 0
    %91 = vmatprep.subr.bf16.mxu0 0
    %92 = vmatpush1.bf16.msra.mxu0 %v83
    %93 = vmatprep.subr.bf16.mxu0 0
    %94 = vmatpush1.bf16.msra.mxu0 %v84
    %95 = vmatprep.subr.bf16.mxu0 0
    %96 = vmatpush1.bf16.msra.mxu0 0
    %97 = vmatprep.subr.bf16.mxu0 0
    %98 = vmatpush1.bf16.msra.mxu0 0
    %99 = vmatprep.subr.bf16.mxu0 0
    %100 = vmatpush1.bf16.msra.mxu0 0
    %101 = vmatprep.subr.bf16.mxu0 0
    %102 = vmatpush1.bf16.msra.mxu0 0
    %103 = vmatprep.subr.bf16.mxu0 0
    %104 = vmatpush1.bf16.msra.mxu0 0
    %105 = vmatprep.subr.bf16.mxu0 0
    %106 = vmatpush1.bf16.msra.mxu0 0
    %107 = vmatprep.subr.bf16.mxu0 0
    %108 = vmatpush1.bf16.msra.mxu0 0
    %109 = vmatprep.subr.bf16.mxu0 0
    %110 = vmatpush1.bf16.msra.mxu0 0
    %111 = vmatprep.subr.bf16.mxu0 0
    %112 = vmatpush1.bf16.msra.mxu0 0
    %113 = vmatprep.subr.bf16.mxu0 0
    %114 = vmatpush1.bf16.msra.mxu0 0
    %115 = vmatprep.subr.bf16.mxu0 0
    %116 = vmatpush1.bf16.msra.mxu0 0
    %117 = vmatprep.subr.bf16.mxu0 0
    %118 = vmatpush1.bf16.msra.mxu0 0
    %119 = vmatprep.subr.bf16.mxu0 0
    %120 = vmatpush1.bf16.msra.mxu0 0
    %121 = vmatprep.subr.bf16.mxu0 0
    %122 = vmatpush1.bf16.msra.mxu0 0
    %123 = vmatprep.mubr.bf16.mxu0 0
    %124 = vmatmul.mubr.bf16.gmra.mrb[0].mxu0 %v89
    %v125 = vpop.f32.mrb[0].mxu0
    %v126 = vadd.f32 0.0, %v125
    %v127 = vpop.f32.mrb[0].mxu0
    %v128 = vpop.f32.mrb[0].mxu0
    %v129 = vadd.f32 0.0, %v128
    %v130 = vpop.f32.mrb[0].mxu0
    %131 = vdwg.mxu0
    %v132 = vadd.f32 %v62, %v126
    %v133 = vadd.f32 %v63, %v129
    %vm134 = vcmask 523264
    %135 = vst.msk [vmem:[#allocation2] sm:$0xff] %vm134, %v132
    %136 = vst.msk [vmem:[#allocation2 + $0x8] sm:$0xff] %vm134, %v133
    // Predicated region
    $region30: #{_lambda_.16} parent=1 // pred_check
      %p137 = pneg %p55
    $region31: #{_lambda_.16} parent=1 // pred_check_branch
      %139 = sbr.rel (%p137) target = $region33
    $region32: #{_lambda_.16} parent=1 // pred_region
      %v140 = vld [vmem:[#allocation2] sm:$0xff]
      %v141 = vld [vmem:[#allocation2 + $0x8] sm:$0xff]
      %v142 = vld [vmem:[#allocation8] sm:$0x1]
      %v144 = vlaneseq
      %v145 = vshrl.u32 %v144, 7
      %v146 = vsub.s32 0, %v145
      %v147 = vrot.slane %v142, %v146
      %v149 = vadd.f32 %v140, %v147
      %v150 = vadd.f32 %v141, %v147
      %v151 = vmul.f32 %v149, 0.5
      %v152 = vmul.f32 %v150, 0.5
      %v153 = vmul.f32 %v149, 0.044715
      %v154 = vmul.f32 %v150, 0.044715
      %v155 = vmul.f32 %v153, %v149
      %v156 = vmul.f32 %v154, %v150
      %v157 = vmul.f32 %v155, %v149
      %v158 = vmul.f32 %v156, %v150
      %v159 = vadd.f32 %v149, %v157
      %v160 = vadd.f32 %v150, %v158
      %v161 = vmul.f32 %v159, 0.7978846
      %v162 = vmul.f32 %v160, 0.7978846
      %v163 = vtanh.pop %v161
      %v164 = vtanh.pop %v162
      %v165 = vadd.f32 %v163, 1.0
      %v166 = vadd.f32 %v164, 1.0
      %v167 = vmul.f32 %v151, %v165
      %v168 = vmul.f32 %v152, %v166
      %v169 = vpack.c.bf16 %v168, %v167
      %v171 = vunpack.c.l.b16 %v169
      %v172 = vunpack.c.h.b16 %v169
      %v173 = vpack.c.b16 %v171, %v171
      %v174 = vpack.c.b16 %v172, %v172
      %vm177 = vcmask 519168
      %178 = vst.msk [vmem:[#allocation9] sm:$0xf] %vm177, %v173
      %179 = vst.msk [vmem:[#allocation9 + $0x4] sm:$0xf] %vm177, %v174
    $region33: #{_lambda_.16} parent=1 // pred_fallthru
      _
    // Predicated region
    $region34: #{_lambda_.16} parent=1 // pred_check
      _
    $region35: #{_lambda_.16} parent=1 // pred_check_branch
      %181 = sbr.rel (0) target = $region37
    $region36: #{_lambda_.16} parent=1 // pred_region
      %s183 = ssub.s32 128, 128
      %184 = vsyncadd [#allocation5], %s183
      %s185 = sshll.u32 [#allocation9], 4
      %s186 = int_to_ptr.vmem [resolvable:$true] %s185
      %191 = dma.vmem_to_hbm [thread:$0]  %s186, 128, %s3, [#allocation5], 64, 64, 4
    $region37: #{_lambda_.16} parent=1 // pred_fallthru
      _
    // Predicated region
    $region38: #{_lambda_.16} parent=1 // pred_check
      _
    $region39: #{_lambda_.16} parent=1 // pred_check_branch
      %193 = sbr.rel (0) target = $region41
    $region40: #{_lambda_.16} parent=1 // pred_region
      %194 = dma.done [#allocation5], 128
    $region41: #{_lambda_.16} parent=1 // pred_fallthru
      _
    %195 = vsyncpa [#allocation4], 1
    %196 = vsyncpa [#allocation7], 1
    %197 = vsyncpa [#allocation5], 1

// kernel: _lambda_.23
$region0: #{_lambda_.23}
  #allocation0 [shape = 'u32[]', space=smem, size = 0x4, offset = 0x4, fixed_abs, tag = 'smem constant byte address 0x4 - core index']
  #allocation1 [shape = 'u32[144,128]{1,0:T(1,128)}', space=vmem, size = 0x12000, scoped, tag = 'internal scratch']
  %s0 = inlined_call_operand.hbm [shape: bf16[2,8,32], index: 0, kind: input, shape index: {}]
  %s1 = inlined_call_operand.hbm [shape: f32[2,32], index: 1, kind: output, shape index: {}]
  %s2 = sld [smem:[#allocation0]]
  $region18: #{_lambda_.23} parent=0
    _
  %s4 = ssub.s32 1, %s2
  %s5 = scalar_select 0, %s4, %s2
  $region1: #{_lambda_.23} parent=0
    #allocation2 [shape = 'u8[4096]{0}', space=vmem, size = 0x1000, scoped, tag = 'input window, operand 0, single buffered']
    #allocation3 [shape = 's32[1]{0}', space=sflag, size = 0x4, scoped, tag = 'scoped memory for _lambda_.23']
    #allocation4 [shape = 's32[1]{0}', space=sflag, size = 0x4, scoped, tag = 'scoped memory for _lambda_.23']
    #allocation5 [shape = 'u8[1024]{0}', space=vmem, size = 0x400, scoped, tag = 'output window, operand 0, single buffered']
    %6 = vsyncpa [#allocation3], 0
    %7 = vsyncpa [#allocation4], 0
    // Predicated region
    $region2: #{_lambda_.23} parent=1 // pred_check
      _
    $region3: #{_lambda_.23} parent=1 // pred_check_branch
      %9 = sbr.rel (0) target = $region5
    $region4: #{_lambda_.23} parent=1 // pred_region
      %s11 = ssub.s32 128, 128
      %12 = vsyncadd [#allocation3], %s11
      %s13 = sshll.u32 [#allocation2], 4
      %s14 = int_to_ptr.vmem [resolvable:$true] %s13
      %19 = dma.hbm_to_vmem [thread:$0]  %s0, 128, %s14, [#allocation3], 64, 64, 4
    $region5: #{_lambda_.23} parent=1 // pred_fallthru
      _
    // Predicated region
    $region6: #{_lambda_.23} parent=1 // pred_check
      _
    $region7: #{_lambda_.23} parent=1 // pred_check_branch
      %21 = sbr.rel (0) target = $region9
    $region8: #{_lambda_.23} parent=1 // pred_region
      %22 = dma.done [#allocation3], 128
    $region9: #{_lambda_.23} parent=1 // pred_fallthru
      _
    %v23 = vld [vmem:[#allocation2] sm:$0xf]
    %v24 = vld [vmem:[#allocation2 + $0x4] sm:$0xf]
    %v25 = vunpack.c.l.bf16 %v23
    %v26 = vunpack.c.l.bf16 %v24
    %vm27 = vcmask 261120
    %v28 = vsel %vm27, %v25, 0.0
    %v29 = vrot.slane %v28, 4
    %v30 = vadd.f32 %v28, %v29
    %v31 = vrot.slane %v30, 2
    %v32 = vadd.f32 %v30, %v31
    %v33 = vrot.slane %v32, 1
    %v34 = vadd.f32 %v32, %v33
    %v35 = vsel %vm27, %v26, 0.0
    %v36 = vrot.slane %v35, 4
    %v37 = vadd.f32 %v35, %v36
    %v38 = vrot.slane %v37, 2
    %v39 = vadd.f32 %v37, %v38
    %v40 = vrot.slane %v39, 1
    %v41 = vadd.f32 %v39, %v40
    %v42 = vsub.f32 %v34, %v25
    %v43 = vsub.f32 %v41, %v26
    %v44 = vmul.f32 %v42, 0.14285715
    %v45 = vmul.f32 %v43, 0.14285715
    %v48 = vrot.slane %v45, 7
    %vm49 = vcmask 1041409
    %v50 = vsel %vm49, %v48, %v44
    %vm52 = vcmask 254976
    %53 = vst.msk [vmem:[#allocation5] sm:$0x3] %vm52, %v50
    // Predicated region
    $region10: #{_lambda_.23} parent=1 // pred_check
      _
    $region11: #{_lambda_.23} parent=1 // pred_check_branch
      %55 = sbr.rel (0) target = $region13
    $region12: #{_lambda_.23} parent=1 // pred_region
      %s57 = ssub.s32 32, 32
      %58 = vsyncadd [#allocation4], %s57
      %s60 = sshll.u32 [#allocation5], 4
      %s61 = int_to_ptr.vmem [resolvable:$true] %s60
      %63 = dma.vmem_to_hbm [thread:$0]  %s61, 32, %s1, [#allocation4]
    $region13: #{_lambda_.23} parent=1 // pred_fallthru
      _
    // Predicated region
    $region14: #{_lambda_.23} parent=1 // pred_check
      _
    $region15: #{_lambda_.23} parent=1 // pred_check_branch
      %65 = sbr.rel (0) target = $region17
    $region16: #{_lambda_.23} parent=1 // pred_region
      %66 = dma.done [#allocation4], 32
    $region17: #{_lambda_.23} parent=1 // pred_fallthru
      _
    %67 = vsyncpa [#allocation3], 1
    %68 = vsyncpa [#allocation4], 1

// kernel: _lambda_.17
$region0: #{_lambda_.17}
  #allocation0 [shape = 'u32[]', space=smem, size = 0x4, offset = 0x4, fixed_abs, tag = 'smem constant byte address 0x4 - core index']
  #allocation1 [shape = 'u32[144,128]{1,0:T(1,128)}', space=vmem, size = 0x12000, scoped, tag = 'internal scratch']
  #allocation2 [shape = 'f32[16,32]{1,0:T(8,128)}', space=vmem, size = 0x2000, scoped, tag = 'scratch operand']
  %s0 = inlined_call_operand.hbm [shape: bf16[16,64], index: 0, kind: input, shape index: {}]
  %s1 = inlined_call_operand.hbm [shape: bf16[64,32], index: 1, kind: input, shape index: {}]
  %s2 = inlined_call_operand.hbm [shape: f32[1,32], index: 2, kind: input, shape index: {}, may-alias: {2,5}]
  %s3 = inlined_call_operand.hbm [shape: bf16[16,32], index: 3, kind: input, shape index: {}]
  %s4 = inlined_call_operand.hbm [shape: f32[1,32], index: 4, kind: input, shape index: {}]
  %s5 = inlined_call_operand.hbm [shape: f32[1,32], index: 5, kind: input, shape index: {}, may-alias: {2,5}]
  %s6 = inlined_call_operand.hbm [shape: bf16[16,32], index: 6, kind: output, shape index: {}]
  %s7 = sld [smem:[#allocation0]]
  $region66: #{_lambda_.17} parent=0
    _
  %s9 = ssub.s32 1, %s7
  %s10 = scalar_select 0, %s9, %s7
  $region1: #{_lambda_.17} parent=0
    #allocation3 [shape = 'u8[4096]{0}', space=vmem, size = 0x1000, scoped, tag = 'input window, operand 0, single buffered']
    #allocation4 [shape = 's32[1]{0}', space=sflag, size = 0x4, scoped, tag = 'scoped memory for _lambda_.17']
    #allocation5 [shape = 's32[1]{0}', space=sflag, size = 0x4, scoped, tag = 'scoped memory for _lambda_.17']
    #allocation6 [shape = 'u8[16384]{0}', space=vmem, size = 0x4000, scoped, tag = 'input window, operand 1, single buffered']
    #allocation7 [shape = 's32[1]{0}', space=sflag, size = 0x4, scoped, tag = 'scoped memory for _lambda_.17']
    #allocation8 [shape = 'u8[512]{0}', space=vmem, size = 0x400, scoped, tag = 'input window, operand 2, single buffered']
    #allocation9 [shape = 'u8[4096]{0}', space=vmem, size = 0x1000, scoped, tag = 'input window, operand 3, single buffered']
    #allocation10 [shape = 's32[1]{0}', space=sflag, size = 0x4, scoped, tag = 'scoped memory for _lambda_.17']
    #allocation11 [shape = 'u8[512]{0}', space=vmem, size = 0x400, scoped, tag = 'input window, operand 4, single buffered']
    #allocation12 [shape = 'u8[512]{0}', space=vmem, size = 0x400, scoped, tag = 'input window, operand 5, single buffered']
    #allocation13 [shape = 's32[1]{0}', space=sflag, size = 0x4, scoped, tag = 'scoped memory for _lambda_.17']
    #allocation14 [shape = 'u8[4096]{0}', space=vmem, size = 0x1000, scoped, tag = 'output window, operand 0, single buffered']
    %11 = vsyncpa [#allocation4], 0
    %12 = vsyncpa [#allocation7], 0
    %13 = vsyncpa [#allocation10], 0
    %14 = vsyncpa [#allocation13], 0
    %15 = vsyncpa [#allocation5], 0
    // Predicated region
    $region2: #{_lambda_.17} parent=1 // pred_check
      _
    $region3: #{_lambda_.17} parent=1 // pred_check_branch
      %17 = sbr.rel (0) target = $region5
    $region4: #{_lambda_.17} parent=1 // pred_region
      %s19 = ssub.s32 128, 128
      %20 = vsyncadd [#allocation4], %s19
      %s21 = sshll.u32 [#allocation3], 4
      %s22 = int_to_ptr.vmem [resolvable:$true] %s21
      %27 = dma.hbm_to_vmem [thread:$0]  %s0, 128, %s22, [#allocation4], 64, 64, 4
    $region5: #{_lambda_.17} parent=1 // pred_fallthru
      _
    // Predicated region
    $region6: #{_lambda_.17} parent=1 // pred_check
      _
    $region7: #{_lambda_.17} parent=1 // pred_check_branch
      %29 = sbr.rel (0) target = $region9
    $region8: #{_lambda_.17} parent=1 // pred_region
      %s31 = ssub.s32 512, 512
      %32 = vsyncadd [#allocation7], %s31
      %s33 = sshll.u32 [#allocation6], 4
      %s34 = int_to_ptr.vmem [resolvable:$true] %s33
      %39 = dma.hbm_to_vmem [thread:$0]  %s1, 512, %s34, [#allocation7], 64, 64, 4
    $region9: #{_lambda_.17} parent=1 // pred_fallthru
      _
    // Predicated region
    $region10: #{_lambda_.17} parent=1 // pred_check
      _
    $region11: #{_lambda_.17} parent=1 // pred_check_branch
      %41 = sbr.rel (0) target = $region13
    $region12: #{_lambda_.17} parent=1 // pred_region
      %s43 = ssub.s32 16, 16
      %44 = vsyncadd [#allocation7], %s43
      %s46 = sshll.u32 [#allocation8], 4
      %s47 = int_to_ptr.vmem [resolvable:$true] %s46
      %49 = dma.hbm_to_vmem [thread:$0]  %s2, 16, %s47, [#allocation7]
    $region13: #{_lambda_.17} parent=1 // pred_fallthru
      _
    // Predicated region
    $region14: #{_lambda_.17} parent=1 // pred_check
      _
    $region15: #{_lambda_.17} parent=1 // pred_check_branch
      %51 = sbr.rel (0) target = $region17
    $region16: #{_lambda_.17} parent=1 // pred_region
      %s53 = ssub.s32 128, 128
      %54 = vsyncadd [#allocation10], %s53
      %s55 = sshll.u32 [#allocation9], 4
      %s56 = int_to_ptr.vmem [resolvable:$true] %s55
      %61 = dma.hbm_to_vmem [thread:$0]  %s3, 128, %s56, [#allocation10], 64, 64, 4
    $region17: #{_lambda_.17} parent=1 // pred_fallthru
      _
    // Predicated region
    $region18: #{_lambda_.17} parent=1 // pred_check
      _
    $region19: #{_lambda_.17} parent=1 // pred_check_branch
      %63 = sbr.rel (0) target = $region21
    $region20: #{_lambda_.17} parent=1 // pred_region
      %s65 = ssub.s32 16, 16
      %66 = vsyncadd [#allocation10], %s65
      %s68 = sshll.u32 [#allocation11], 4
      %s69 = int_to_ptr.vmem [resolvable:$true] %s68
      %71 = dma.hbm_to_vmem [thread:$0]  %s4, 16, %s69, [#allocation10]
    $region21: #{_lambda_.17} parent=1 // pred_fallthru
      _
    // Predicated region
    $region22: #{_lambda_.17} parent=1 // pred_check
      _
    $region23: #{_lambda_.17} parent=1 // pred_check_branch
      %73 = sbr.rel (0) target = $region25
    $region24: #{_lambda_.17} parent=1 // pred_region
      %s75 = ssub.s32 16, 16
      %76 = vsyncadd [#allocation13], %s75
      %s78 = sshll.u32 [#allocation12], 4
      %s79 = int_to_ptr.vmem [resolvable:$true] %s78
      %81 = dma.hbm_to_vmem [thread:$0]  %s5, 16, %s79, [#allocation13]
    $region25: #{_lambda_.17} parent=1 // pred_fallthru
      _
    // Predicated region
    $region26: #{_lambda_.17} parent=1 // pred_check
      _
    $region27: #{_lambda_.17} parent=1 // pred_check_branch
      %83 = sbr.rel (0) target = $region29
    $region28: #{_lambda_.17} parent=1 // pred_region
      %84 = dma.done [#allocation4], 128
    $region29: #{_lambda_.17} parent=1 // pred_fallthru
      _
    // Predicated region
    $region30: #{_lambda_.17} parent=1 // pred_check
      _
    $region31: #{_lambda_.17} parent=1 // pred_check_branch
      %86 = sbr.rel (0) target = $region33
    $region32: #{_lambda_.17} parent=1 // pred_region
      %87 = dma.done [#allocation7], 512
    $region33: #{_lambda_.17} parent=1 // pred_fallthru
      _
    // Predicated region
    $region34: #{_lambda_.17} parent=1 // pred_check
      _
    $region35: #{_lambda_.17} parent=1 // pred_check_branch
      %89 = sbr.rel (0) target = $region37
    $region36: #{_lambda_.17} parent=1 // pred_region
      %90 = dma.done [#allocation7], 16
    $region37: #{_lambda_.17} parent=1 // pred_fallthru
      _
    // Predicated region
    $region38: #{_lambda_.17} parent=1 // pred_check
      _
    $region39: #{_lambda_.17} parent=1 // pred_check_branch
      %92 = sbr.rel (0) target = $region41
    $region40: #{_lambda_.17} parent=1 // pred_region
      %93 = dma.done [#allocation10], 128
    $region41: #{_lambda_.17} parent=1 // pred_fallthru
      _
    // Predicated region
    $region42: #{_lambda_.17} parent=1 // pred_check
      _
    $region43: #{_lambda_.17} parent=1 // pred_check_branch
      %95 = sbr.rel (0) target = $region45
    $region44: #{_lambda_.17} parent=1 // pred_region
      %96 = dma.done [#allocation10], 16
    $region45: #{_lambda_.17} parent=1 // pred_fallthru
      _
    // Predicated region
    $region46: #{_lambda_.17} parent=1 // pred_check
      _
    $region47: #{_lambda_.17} parent=1 // pred_check_branch
      %98 = sbr.rel (0) target = $region49
    $region48: #{_lambda_.17} parent=1 // pred_region
      %99 = dma.done [#allocation13], 16
    $region49: #{_lambda_.17} parent=1 // pred_fallthru
      _
    %p101 = scmp.eq.s32.totalorder 0, 0
    // Predicated region
    $region50: #{_lambda_.17} parent=1 // pred_check
      %p102 = pneg %p101
    $region51: #{_lambda_.17} parent=1 // pred_check_branch
      %104 = sbr.rel (%p102) target = $region53
    $region52: #{_lambda_.17} parent=1 // pred_region
      %vm105 = vcmask 261120
      %106 = vst.msk [vmem:[#allocation2] sm:$0xff] %vm105, 0.0
      %107 = vst.msk [vmem:[#allocation2 + $0x8] sm:$0xff] %vm105, 0.0
    $region53: #{_lambda_.17} parent=1 // pred_fallthru
      _
    %v108 = vld [vmem:[#allocation2] sm:$0xff]
    %v109 = vld [vmem:[#allocation2 + $0x8] sm:$0xff]
    %v110 = vld [vmem:[#allocation3] sm:$0xf]
    %v111 = vld [vmem:[#allocation3 + $0x4] sm:$0xf]
    %v112 = vld [vmem:[#allocation6] sm:$0xf]
    %v113 = vld [vmem:[#allocation6 + $0x4] sm:$0xf]
    %v114 = vld [vmem:[#allocation6 + $0x8] sm:$0xf]
    %v115 = vld [vmem:[#allocation6 + $0xc] sm:$0xf]
    %v116 = vld [vmem:[#allocation6 + $0x10] sm:$0xf]
    %v117 = vld [vmem:[#allocation6 + $0x14] sm:$0xf]
    %v118 = vld [vmem:[#allocation6 + $0x18] sm:$0xf]
    %v119 = vld [vmem:[#allocation6 + $0x1c] sm:$0xf]
    %v122 = vunpack.c.l.b16 %v110
    %v123 = vunpack.c.l.b16 %v111
    %v124 = vpack.c.b16 %v123, %v122
    %v133 = vunpack.c.l.b16 %v112
    %v134 = vunpack.c.l.b16 %v113
    %v135 = vunpack.c.l.b16 %v114
    %v136 = vunpack.c.l.b16 %v115
    %v137 = vunpack.c.l.b16 %v116
    %v138 = vunpack.c.l.b16 %v117
    %v139 = vunpack.c.l.b16 %v118
    %v140 = vunpack.c.l.b16 %v119
    %v141 = vpack.c.b16 %v134, %v133
    %v142 = vpack.c.b16 %v136, %v135
    %v143 = vpack.c.b16 %v138, %v137
    %v144 = vpack.c.b16 %v140, %v139
    %vm149 = vcmask 523264
    %v151 = vsel %vm149, %v124, 0
    %153 = vmatprep.subr.bf16.mxu0 0
    %154 = vmatpush1.bf16.msra.mxu0 %v141
    %155 = vmatprep.subr.bf16.mxu0 0
    %156 = vmatpush1.bf16.msra.mxu0 %v142
    %157 = vmatprep.subr.bf16.mxu0 0
    %158 = vmatpush1.bf16.msra.mxu0 %v143
    %159 = vmatprep.subr.bf16.mxu0 0
    %160 = vmatpush1.bf16.msra.mxu0 %v144
    %161 = vmatprep.subr.bf16.mxu0 0
    %162 = vmatpush1.bf16.msra.mxu0 0
    %163 = vmatprep.subr.bf16.mxu0 0
    %164 = vmatpush1.bf16.msra.mxu0 0
    %165 = vmatprep.subr.bf16.mxu0 0
    %166 = vmatpush1.bf16.msra.mxu0 0
    %167 = vmatprep.subr.bf16.mxu0 0
    %168 = vmatpush1.bf16.msra.mxu0 0
    %169 = vmatprep.subr.bf16.mxu0 0
    %170 = vmatpush1.bf16.msra.mxu0 0
    %171 = vmatprep.subr.bf16.mxu0 0
    %172 = vmatpush1.bf16.msra.mxu0 0
    %173 = vmatprep.subr.bf16.mxu0 0
    %174 = vmatpush1.bf16.msra.mxu0 0
    %175 = vmatprep.subr.bf16.mxu0 0
    %176 = vmatpush1.bf16.msra.mxu0 0
    %177 = vmatprep.subr.bf16.mxu0 0
    %178 = vmatpush1.bf16.msra.mxu0 0
    %179 = vmatprep.subr.bf16.mxu0 0
    %180 = vmatpush1.bf16.msra.mxu0 0
    %181 = vmatprep.subr.bf16.mxu0 0
    %182 = vmatpush1.bf16.msra.mxu0 0
    %183 = vmatprep.subr.bf16.mxu0 0
    %184 = vmatpush1.bf16.msra.mxu0 0
    %185 = vmatprep.mubr.bf16.mxu0 0
    %186 = vmatmul.mubr.bf16.gmra.mrb[0].mxu0 %v151
    %v187 = vpop.f32.mrb[0].mxu0
    %v188 = vadd.f32 0.0, %v187
    %v189 = vpop.f32.mrb[0].mxu0
    %v190 = vpop.f32.mrb[0].mxu0
    %v191 = vadd.f32 0.0, %v190
    %v192 = vpop.f32.mrb[0].mxu0
    %193 = vdwg.mxu0
    %v194 = vadd.f32 %v108, %v188
    %v195 = vadd.f32 %v109, %v191
    %vm196 = vcmask 261120
    %197 = vst.msk [vmem:[#allocation2] sm:$0xff] %vm196, %v194
    %198 = vst.msk [vmem:[#allocation2 + $0x8] sm:$0xff] %vm196, %v195
    // Predicated region
    $region54: #{_lambda_.17} parent=1 // pred_check
      %p199 = pneg %p101
    $region55: #{_lambda_.17} parent=1 // pred_check_branch
      %201 = sbr.rel (%p199) target = $region57
    $region56: #{_lambda_.17} parent=1 // pred_region
      %v202 = vld [vmem:[#allocation2] sm:$0xff]
      %v203 = vld [vmem:[#allocation2 + $0x8] sm:$0xff]
      %v204 = vld [vmem:[#allocation8] sm:$0x1]
      %v206 = vlaneseq
      %v207 = vshrl.u32 %v206, 7
      %v208 = vsub.s32 0, %v207
      %v209 = vrot.slane %v204, %v208
      %v211 = vadd.f32 %v202, %v209
      %v212 = vadd.f32 %v203, %v209
      %v213 = vld [vmem:[#allocation9] sm:$0xf]
      %v214 = vld [vmem:[#allocation9 + $0x4] sm:$0xf]
      %v215 = vunpack.c.l.bf16 %v213
      %v216 = vunpack.c.l.bf16 %v214
      %v217 = vadd.f32 %v211, %v215
      %v218 = vadd.f32 %v212, %v216
      %v219 = vsel %vm196, %v217, 0.0
      %220 = vadd.xlane.f32.xlu0 %v219
      %v221 = vpop.xlane.xlu0 %220
      %v222 = vsel %vm196, %v218, 0.0
      %223 = vadd.xlane.f32.xlu0 %v222
      %v224 = vpop.xlane.xlu0 %223
      %v225 = vrcp.pop 32.0
      %v226 = vmul.f32 %v221, %v225
      %v227 = vmul.f32 %v224, %v225
      %v228 = vsub.f32 %v217, %v226
      %v229 = vsub.f32 %v218, %v227
      %v230 = vmul.f32 %v228, %v228
      %v231 = vmul.f32 %v229, %v229
      %v232 = vsel %vm196, %v230, 0.0
      %233 = vadd.xlane.f32.xlu0 %v232
      %v234 = vpop.xlane.xlu0 %233
      %v235 = vsel %vm196, %v231, 0.0
      %236 = vadd.xlane.f32.xlu0 %v235
      %v237 = vpop.xlane.xlu0 %236
      %v238 = vmul.f32 %v234, %v225
      %v239 = vmul.f32 %v237, %v225
      %v240 = vadd.f32 %v238, 1e-12
      %v241 = vadd.f32 %v239, 1e-12
      %v242 = vrsqrt.pop %v240
      %v243 = vrsqrt.pop %v241
      %v244 = vmul.f32 %v228, %v242
      %v245 = vmul.f32 %v229, %v243
      %v246 = vld [vmem:[#allocation11] sm:$0x1]
      %v248 = vlaneseq
      %v249 = vshrl.u32 %v248, 7
      %v250 = vsub.s32 0, %v249
      %v251 = vrot.slane %v246, %v250
      %v253 = vmul.f32 %v244, %v251
      %v254 = vmul.f32 %v245, %v251
      %v255 = vld [vmem:[#allocation12] sm:$0x1]
      %v257 = vlaneseq
      %v258 = vshrl.u32 %v257, 7
      %v259 = vsub.s32 0, %v258
      %v260 = vrot.slane %v255, %v259
      %v262 = vadd.f32 %v253, %v260
      %v263 = vadd.f32 %v254, %v260
      %v264 = vpack.c.bf16 %v263, %v262
      %v266 = vunpack.c.l.b16 %v264
      %v267 = vunpack.c.h.b16 %v264
      %v268 = vpack.c.b16 %v266, %v266
      %v269 = vpack.c.b16 %v267, %v267
      %vm272 = vcmask 257024
      %273 = vst.msk [vmem:[#allocation14] sm:$0xf] %vm272, %v268
      %274 = vst.msk [vmem:[#allocation14 + $0x4] sm:$0xf] %vm272, %v269
    $region57: #{_lambda_.17} parent=1 // pred_fallthru
      _
    // Predicated region
    $region58: #{_lambda_.17} parent=1 // pred_check
      _
    $region59: #{_lambda_.17} parent=1 // pred_check_branch
      %276 = sbr.rel (0) target = $region61
    $region60: #{_lambda_.17} parent=1 // pred_region
      %s278 = ssub.s32 128, 128
      %279 = vsyncadd [#allocation5], %s278
      %s280 = sshll.u32 [#allocation14], 4
      %s281 = int_to_ptr.vmem [resolvable:$true] %s280
      %286 = dma.vmem_to_hbm [thread:$0]  %s281, 128, %s6, [#allocation5], 64, 64, 4
    $region61: #{_lambda_.17} parent=1 // pred_fallthru
      _
    // Predicated region
    $region62: #{_lambda_.17} parent=1 // pred_check
      _
    $region63: #{_lambda_.17} parent=1 // pred_check_branch
      %288 = sbr.rel (0) target = $region65
    $region64: #{_lambda_.17} parent=1 // pred_region
      %289 = dma.done [#allocation5], 128
    $region65: #{_lambda_.17} parent=1 // pred_fallthru
      _
    %290 = vsyncpa [#allocation4], 1
    %291 = vsyncpa [#allocation7], 1
    %292 = vsyncpa [#allocation10], 1
    %293 = vsyncpa [#allocation13], 1
    %294 = vsyncpa [#allocation5], 1

</llo_original>
